<compile_context>
chip_gen: v6e
topology: v6e:2x2x1
jax: 0.10.0
libtpu: 0.0.40
codegen_flags: <defaults>
</compile_context>

<pallas_src>
import functools

import jax
import jax.numpy as jnp
from jax.experimental import pallas as pl
from jax.experimental.pallas import tpu as pltpu


_TILE = 256  # row tile (TM) and reduction tile (TK); multiple of (8, 128)


# ----------------------------------------------------------------------------
# Kernel 1: tiled aggregation  agg = A_norm @ M   (f32 accumulation)
# grid = (row tiles [parallel], k tiles [arbitrary, last])
# ----------------------------------------------------------------------------
def _agg_kernel(a_ref, m_ref, out_ref):
    @pl.when(pl.program_id(1) == 0)
    def _():
        out_ref[...] = jnp.zeros_like(out_ref)
    out_ref[...] += jnp.dot(a_ref[...], m_ref[...],
                            preferred_element_type=jnp.float32)


def _aggregate(a, m, *, n_pad, hidden, vmem_limit):
    nt = n_pad // _TILE
    cost = pl.CostEstimate(
        flops=2 * n_pad * n_pad * hidden,
        transcendentals=0,
        bytes_accessed=2 * n_pad * n_pad + 2 * n_pad * hidden + 4 * n_pad * hidden)
    return pl.pallas_call(
        _agg_kernel,
        out_shape=jax.ShapeDtypeStruct((n_pad, hidden), jnp.float32),
        grid=(nt, nt),
        in_specs=[pl.BlockSpec((_TILE, _TILE), lambda i, k: (i, k)),
                  pl.BlockSpec((_TILE, hidden), lambda i, k: (k, 0))],
        out_specs=pl.BlockSpec((_TILE, hidden), lambda i, k: (i, 0)),
        compiler_params=pltpu.CompilerParams(
            dimension_semantics=("parallel", "arbitrary"),
            vmem_limit_bytes=vmem_limit),
        cost_estimate=cost,
    )(a, m)


# ----------------------------------------------------------------------------
# Kernel 2: fused BN-apply + sigmoid + next-layer weight matmul (row-tiled)
#   out = sigmoid(agg * s + t) @ W_next      (bf16 MXU operands, f32 acc)
# ----------------------------------------------------------------------------
def _bn_sig_matmul_kernel(agg_ref, s_ref, t_ref, w_ref, out_ref):
    h = jax.nn.sigmoid(agg_ref[...] * s_ref[...] + t_ref[...])          # EUP
    out_ref[...] = jnp.dot(h.astype(jnp.bfloat16), w_ref[...],
                           preferred_element_type=jnp.float32).astype(jnp.bfloat16)


def _bn_sig_matmul(agg, s, t, w, *, n_pad, hidden, vmem_limit):
    nt = n_pad // _TILE
    cost = pl.CostEstimate(
        flops=2 * n_pad * hidden * hidden + 4 * n_pad * hidden,
        transcendentals=n_pad * hidden,
        bytes_accessed=4 * n_pad * hidden + 2 * hidden * hidden
                       + 2 * n_pad * hidden + 8 * hidden)
    return pl.pallas_call(
        _bn_sig_matmul_kernel,
        out_shape=jax.ShapeDtypeStruct((n_pad, hidden), jnp.bfloat16),
        grid=(nt,),
        in_specs=[pl.BlockSpec((_TILE, hidden), lambda i: (i, 0)),
                  pl.BlockSpec((1, hidden), lambda i: (0, 0)),
                  pl.BlockSpec((1, hidden), lambda i: (0, 0)),
                  pl.BlockSpec((hidden, hidden), lambda i: (0, 0))],
        out_specs=pl.BlockSpec((_TILE, hidden), lambda i: (i, 0)),
        compiler_params=pltpu.CompilerParams(
            dimension_semantics=("parallel",),
            vmem_limit_bytes=vmem_limit),
        cost_estimate=cost,
    )(agg, s, t, w)


# ----------------------------------------------------------------------------
# Kernel 3: fused BN-apply + sigmoid + global_mean_pool (k-tiled reduction)
#   out = (pool_onehot @ sigmoid(agg * s + t)) * (1 / count)
# ----------------------------------------------------------------------------
def _bn_sig_pool_kernel(agg_ref, s_ref, t_ref, pool_ref, invcnt_ref, out_ref):
    k = pl.program_id(0)

    @pl.when(k == 0)
    def _():
        out_ref[...] = jnp.zeros_like(out_ref)

    h = jax.nn.sigmoid(agg_ref[...] * s_ref[...] + t_ref[...]).astype(jnp.bfloat16)
    out_ref[...] += jnp.dot(pool_ref[...], h, preferred_element_type=jnp.float32)

    @pl.when(k == pl.num_programs(0) - 1)
    def _():
        out_ref[...] *= invcnt_ref[...]


def _bn_sig_pool(agg, s, t, pool, invcnt, *, num_graphs, n_pad, hidden, vmem_limit):
    nt = n_pad // _TILE
    cost = pl.CostEstimate(
        flops=2 * num_graphs * n_pad * hidden + 4 * n_pad * hidden,
        transcendentals=n_pad * hidden,
        bytes_accessed=4 * n_pad * hidden + 2 * num_graphs * n_pad
                       + 4 * num_graphs * hidden + 4 * num_graphs + 8 * hidden)
    return pl.pallas_call(
        _bn_sig_pool_kernel,
        out_shape=jax.ShapeDtypeStruct((num_graphs, hidden), jnp.float32),
        grid=(nt,),
        in_specs=[pl.BlockSpec((_TILE, hidden), lambda k: (k, 0)),
                  pl.BlockSpec((1, hidden), lambda k: (0, 0)),
                  pl.BlockSpec((1, hidden), lambda k: (0, 0)),
                  pl.BlockSpec((num_graphs, _TILE), lambda k: (0, k)),
                  pl.BlockSpec((num_graphs, 1), lambda k: (0, 0))],
        out_specs=pl.BlockSpec((num_graphs, hidden), lambda k: (0, 0)),
        compiler_params=pltpu.CompilerParams(
            dimension_semantics=("arbitrary",),
            vmem_limit_bytes=vmem_limit),
        cost_estimate=cost,
    )(agg, s, t, pool, invcnt)


# ----------------------------------------------------------------------------
# Generation-aware VMEM budget (85% of physical capacity, with a safe fallback)
# ----------------------------------------------------------------------------
def _vmem_limit_bytes():
    try:
        cap = int(pltpu.get_tpu_info().vmem_capacity_bytes)
    except Exception:  # off-device tracing / API drift -> conservative default
        cap = 64 * 2 ** 20
    return int(cap * 0.85)


# ----------------------------------------------------------------------------
# Wrapper: operator construction (bf16 adjacency / pool), hoisted x@W1,
# two-pass BN stats between kernels.  (When graph topology is static across
# calls, the caller should cache `a` and `pool` instead of rebuilding them.)
# ----------------------------------------------------------------------------
@functools.partial(jax.jit, static_argnames=("num_graphs",))
def cgcnn_encoder_forward(x, edge_index, edge_attr, batch, params, *, num_graphs):
    # edge_attr accepted for API parity but unused (GCNConv ignores it).
    del edge_attr
    n = x.shape[0]
    hidden = params["w1"].shape[1]
    assert hidden % 128 == 0, "hidden_dim must be a multiple of 128 (lane width)"
    n_pad = max(_TILE, -(-n // _TILE) * _TILE)
    vmem_limit = _vmem_limit_bytes()

    # ---- normalized adjacency, scattered directly into bf16 (zero-padded) ---
    row, col = edge_index[0], edge_index[1]              # source, target
    self_idx = jnp.arange(n, dtype=edge_index.dtype)
    row = jnp.concatenate([row, self_idx])               # add self loops
    col = jnp.concatenate([col, self_idx])
    deg = jnp.zeros((n,), jnp.float32).at[col].add(1.0)
    dinv = jnp.where(deg > 0, jax.lax.rsqrt(deg), 0.0)
    norm = (dinv[row] * dinv[col]).astype(jnp.bfloat16)
    # message from source j flows to target i:  A[i, j] = norm.
    # Padded rows/columns stay exactly zero -> they never touch real nodes.
    a = jnp.zeros((n_pad, n_pad), jnp.bfloat16).at[col, row].add(norm)

    # ---- mean-pool operator: exact bf16 one-hot + f32 1/count ---------------
    batch_pad = jnp.full((n_pad,), num_graphs, batch.dtype).at[:n].set(batch)
    pool = (batch_pad[None, :] ==
            jnp.arange(num_graphs, dtype=batch.dtype)[:, None]).astype(jnp.bfloat16)
    counts = jnp.zeros((num_graphs,), jnp.float32).at[batch].add(1.0)[:, None]
    invcnt = jnp.where(counts > 0, 1.0 / counts, 0.0)

    # ---- hoisted layer-1 weight matmul (kernels only see lane-dense [N,H]) --
    xw1 = jnp.zeros((n_pad, hidden), jnp.bfloat16)
    xw1 = xw1.at[:n].set((x @ params["w1"]).astype(jnp.bfloat16))

    w2 = params["w2"].astype(jnp.bfloat16)
    w3 = params["w3"].astype(jnp.bfloat16)

    def bn_scale_shift(agg, gamma, beta):
        # Train-mode BN stats over the TRUE (unpadded) rows; numerically robust
        # two-pass variance (no E[x^2]-E[x]^2 cancellation); biased var, eps=1e-5.
        valid = agg[:n]
        mean = jnp.mean(valid, axis=0, keepdims=True)
        var = jnp.mean(jnp.square(valid - mean), axis=0, keepdims=True)
        s = gamma * jax.lax.rsqrt(var + 1e-5)
        return s, beta - mean * s

    kw = dict(n_pad=n_pad, hidden=hidden, vmem_limit=vmem_limit)

    # layer 1
    agg1 = _aggregate(a, xw1, **kw)
    s1, t1 = bn_scale_shift(agg1, params["g1"], params["be1"])
    hw2 = _bn_sig_matmul(agg1, s1, t1, w2, **kw)          # sigmoid(BN(.)) @ W2

    # layer 2
    agg2 = _aggregate(a, hw2, **kw)
    s2, t2 = bn_scale_shift(agg2, params["g2"], params["be2"])
    hw3 = _bn_sig_matmul(agg2, s2, t2, w3, **kw)          # sigmoid(BN(.)) @ W3

    # layer 3 + global_mean_pool
    agg3 = _aggregate(a, hw3, **kw)
    s3, t3 = bn_scale_shift(agg3, params["g3"], params["be3"])
    return _bn_sig_pool(agg3, s3, t3, pool, invcnt, num_graphs=num_graphs, **kw)


# ----------------------------------------------------------------------------
# Deterministic parameter init (glorot-ish weights, BN gamma=1 beta=0).
# No conv biases: they are cancelled exactly by the following train-mode BN.
# ----------------------------------------------------------------------------
def init_params(key, node_dim, hidden_dim):
    def glorot(key, fan_in, fan_out):
        scale = jnp.sqrt(6.0 / (fan_in + fan_out))
        return jax.random.uniform(key, (fan_in, fan_out), jnp.float32, -scale, scale)

    k1, k2, k3 = jax.random.split(key, 3)
    return {
        "w1": glorot(k1, node_dim, hidden_dim),
        "g1": jnp.ones((1, hidden_dim), jnp.float32),
        "be1": jnp.zeros((1, hidden_dim), jnp.float32),
        "w2": glorot(k2, hidden_dim, hidden_dim),
        "g2": jnp.ones((1, hidden_dim), jnp.float32),
        "be2": jnp.zeros((1, hidden_dim), jnp.float32),
        "w3": glorot(k3, hidden_dim, hidden_dim),
        "g3": jnp.ones((1, hidden_dim), jnp.float32),
        "be3": jnp.zeros((1, hidden_dim), jnp.float32),
    }


# Pure-JAX f32 reference (PyTorch-semantics forward) for a sanity check.
# Kernels use bf16 matmul operands, so compare with a loose tolerance.
def _reference_forward(x, edge_index, batch, params, num_graphs):
    n = x.shape[0]
    row, col = edge_index[0], edge_index[1]
    self_idx = jnp.arange(n, dtype=edge_index.dtype)
    row = jnp.concatenate([row, self_idx])
    col = jnp.concatenate([col, self_idx])
    deg = jnp.zeros((n,), jnp.float32).at[col].add(1.0)
    dinv = jnp.where(deg > 0, jax.lax.rsqrt(deg), 0.0)
    a = jnp.zeros((n, n), jnp.float32).at[col, row].add(dinv[row] * dinv[col])
    one_hot = (batch[None, :] == jnp.arange(num_graphs)[:, None]).astype(jnp.float32)
    pool = one_hot / jnp.maximum(jnp.sum(one_hot, axis=1, keepdims=True), 1.0)
    h = x
    for i in (1, 2, 3):
        agg = a @ (h @ params[f"w{i}"])
        mean = jnp.mean(agg, axis=0, keepdims=True)
        var = jnp.mean((agg - mean) ** 2, axis=0, keepdims=True)
        hn = (agg - mean) / jnp.sqrt(var + 1e-5) * params[f"g{i}"] + params[f"be{i}"]
        h = jax.nn.sigmoid(hn)
    return pool @ h


if __name__ == "__main__":
    node_dim, edge_dim, hidden_dim = 8, 4, 128      # module default hidden_dim=128
    num_nodes, num_graphs = 16, 2

    key = jax.random.PRNGKey(0)
    k_x, k_e, k_attr, k_p = jax.random.split(key, 4)

    # Node features.
    x = jax.random.normal(k_x, (num_nodes, node_dim), jnp.float32)

    # Two graphs of 8 nodes each: ring edges within each graph (both directions).
    src, dst = [], []
    for g in range(num_graphs):
        base = g * 8
        for i in range(8):
            j = (i + 1) % 8
            src += [base + i, base + j]
            dst += [base + j, base + i]
    edge_index = jnp.array([src, dst], dtype=jnp.int32)                 # [2, E]
    edge_attr = jax.random.normal(k_attr, (edge_index.shape[1], edge_dim), jnp.float32)
    batch = jnp.repeat(jnp.arange(num_graphs, dtype=jnp.int32), 8)      # [N]

    params = init_params(k_p, node_dim, hidden_dim)

    out = cgcnn_encoder_forward(x, edge_index, edge_attr, batch, params,
                                num_graphs=num_graphs)
    out = jax.block_until_ready(out)

    ref = _reference_forward(x, edge_index, batch, params, num_graphs)
    assert out.shape == (num_graphs, hidden_dim)
    assert jnp.all(jnp.isfinite(out)), "non-finite output"
    assert jnp.allclose(out, ref, atol=5e-2, rtol=5e-2), "mismatch vs f32 reference"

    print("KERNEL_OK")
</pallas_src>

<mosaic_0001>
module attributes {stable_mosaic.version = 11 : i64} {
  func.func private @main(%arg0: i32) attributes {dimension_semantics = [#tpu.dimension_semantics<core_parallel>], iteration_bounds = array<i64: 2>, tpu.core_type = #tpu.core_type<sc_scalar_subcore>, window_params = []} {
    return
  }
}

module attributes {stable_mosaic.version = 11 : i64} {
  func.func private @main(%arg0: i32) attributes {dimension_semantics = [#tpu.dimension_semantics<core_parallel>], iteration_bounds = array<i64: 2>, tpu.core_type = #tpu.core_type<sc_scalar_subcore>, window_params = []} {
    return
  }
}

module attributes {stable_mosaic.version = 11 : i64} {
  func.func @_agg_kernel(%arg0: i32, %arg1: i32, %arg2: memref<256x256xbf16, #tpu.memory_space<vmem>>, %arg3: memref<256x128xbf16, #tpu.memory_space<vmem>>, %arg4: memref<256x128xf32, #tpu.memory_space<vmem>>) attributes {dimension_semantics = [#tpu.dimension_semantics<parallel>, #tpu.dimension_semantics<arbitrary>], iteration_bounds = array<i64: 1, 1>, scalar_prefetch = 0 : i64, scratch_operands = 0 : i64, tpu.core_type = #tpu.core_type<tc>, window_params = [{transform_indices = @transform_0, window_bounds = array<i64: 256, 256>}, {transform_indices = @transform_1, window_bounds = array<i64: 256, 128>}, {transform_indices = @transform_2, window_bounds = array<i64: 256, 128>}]} {
    %c0_i32 = arith.constant 0 : i32
    %0 = arith.cmpi eq, %arg1, %c0_i32 : i32
    %1 = arith.extui %0 : i1 to i32
    %c0_i32_0 = arith.constant 0 : i32
    %2 = arith.cmpi ne, %1, %c0_i32_0 : i32
    scf.if %2 {
      %cst_8 = arith.constant 0.000000e+00 : f32
      %9 = vector.broadcast %cst_8 : f32 to vector<256x128xf32>
      %c0_9 = arith.constant 0 : index
      %c0_10 = arith.constant 0 : index
      %10 = vector.load %arg4[%c0_9, %c0_10] : memref<256x128xf32, #tpu.memory_space<vmem>>, vector<256x128xf32>
      tpu.vector_store %arg4[%c0_9, %c0_10], %9 {strides = array<i32>} : memref<256x128xf32, #tpu.memory_space<vmem>>, vector<256x128xf32>,
    } else {
    }
    %c0 = arith.constant 0 : index
    %c0_1 = arith.constant 0 : index
    %3 = vector.load %arg4[%c0, %c0_1] : memref<256x128xf32, #tpu.memory_space<vmem>>, vector<256x128xf32>
    %c0_2 = arith.constant 0 : index
    %c0_3 = arith.constant 0 : index
    %4 = vector.load %arg2[%c0_2, %c0_3] : memref<256x256xbf16, #tpu.memory_space<vmem>>, vector<256x256xbf16>
    %c0_4 = arith.constant 0 : index
    %c0_5 = arith.constant 0 : index
    %5 = vector.load %arg3[%c0_4, %c0_5] : memref<256x128xbf16, #tpu.memory_space<vmem>>, vector<256x128xbf16>
    %cst = arith.constant dense<0.000000e+00> : vector<256x128xf32>
    %6 = tpu.matmul %4, %5, %cst {dimension_numbers = #tpu.dot_dimension_numbers<[1], [0], [0], [1], [0, 0, 1, 1], [], []>} : vector<256x256xbf16>, vector<256x128xbf16>, vector<256x128xf32> -> vector<256x128xf32>
    %7 = arith.addf %3, %6 : vector<256x128xf32>
    %c0_6 = arith.constant 0 : index
    %c0_7 = arith.constant 0 : index
    %8 = vector.load %arg4[%c0_6, %c0_7] : memref<256x128xf32, #tpu.memory_space<vmem>>, vector<256x128xf32>
    tpu.vector_store %arg4[%c0_6, %c0_7], %7 {strides = array<i32>} : memref<256x128xf32, #tpu.memory_space<vmem>>, vector<256x128xf32>,
    return
  }
  func.func @transform_0(%arg0: i32, %arg1: i32) -> (i32, i32) {
    %c0_i32 = arith.constant 0 : i32
    return %arg0, %arg1 : i32, i32
  }
  func.func @transform_1(%arg0: i32, %arg1: i32) -> (i32, i32) {
    %c0_i32 = arith.constant 0 : i32
    %c0_i32_0 = arith.constant 0 : i32
    return %arg1, %c0_i32 : i32, i32
  }
  func.func @transform_2(%arg0: i32, %arg1: i32) -> (i32, i32) {
    %c0_i32 = arith.constant 0 : i32
    %c0_i32_0 = arith.constant 0 : i32
    return %arg0, %c0_i32 : i32, i32
  }
}

module attributes {stable_mosaic.version = 11 : i64} {
  func.func @_bn_sig_matmul_kernel(%arg0: i32, %arg1: memref<256x128xf32, #tpu.memory_space<vmem>>, %arg2: memref<1x128xf32, #tpu.memory_space<vmem>>, %arg3: memref<1x128xf32, #tpu.memory_space<vmem>>, %arg4: memref<128x128xbf16, #tpu.memory_space<vmem>>, %arg5: memref<256x128xbf16, #tpu.memory_space<vmem>>) attributes {dimension_semantics = [#tpu.dimension_semantics<parallel>], iteration_bounds = array<i64: 1>, scalar_prefetch = 0 : i64, scratch_operands = 0 : i64, tpu.core_type = #tpu.core_type<tc>, window_params = [{transform_indices = @transform_0, window_bounds = array<i64: 256, 128>}, {pipeline_mode = #tpu.pipeline_mode<synchronous>, transform_indices = @transform_1, window_bounds = array<i64: 1, 128>}, {pipeline_mode = #tpu.pipeline_mode<synchronous>, transform_indices = @transform_2, window_bounds = array<i64: 1, 128>}, {pipeline_mode = #tpu.pipeline_mode<synchronous>, transform_indices = @transform_3, window_bounds = array<i64: 128, 128>}, {transform_indices = @transform_4, window_bounds = array<i64: 256, 128>}]} {
    %c0 = arith.constant 0 : index
    %c0_0 = arith.constant 0 : index
    %0 = vector.load %arg1[%c0, %c0_0] : memref<256x128xf32, #tpu.memory_space<vmem>>, vector<256x128xf32>
    %c0_1 = arith.constant 0 : index
    %c0_2 = arith.constant 0 : index
    %1 = vector.load %arg2[%c0_1, %c0_2] : memref<1x128xf32, #tpu.memory_space<vmem>>, vector<1x128xf32>
    %2 = vector.broadcast %1 : vector<1x128xf32> to vector<256x128xf32>
    %3 = arith.mulf %0, %2 : vector<256x128xf32>
    %c0_3 = arith.constant 0 : index
    %c0_4 = arith.constant 0 : index
    %4 = vector.load %arg3[%c0_3, %c0_4] : memref<1x128xf32, #tpu.memory_space<vmem>>, vector<1x128xf32>
    %5 = vector.broadcast %4 : vector<1x128xf32> to vector<256x128xf32>
    %6 = arith.addf %3, %5 : vector<256x128xf32>
    %7 = arith.negf %6 : vector<256x128xf32>
    %8 = math.exp %7 : vector<256x128xf32>
    %cst = arith.constant 1.000000e+00 : f32
    %9 = vector.broadcast %cst : f32 to vector<256x128xf32>
    %10 = arith.addf %9, %8 : vector<256x128xf32>
    %11 = arith.divf %9, %10 : vector<256x128xf32>
    %12 = arith.truncf %11 : vector<256x128xf32> to vector<256x128xbf16>
    %c0_5 = arith.constant 0 : index
    %c0_6 = arith.constant 0 : index
    %13 = vector.load %arg4[%c0_5, %c0_6] : memref<128x128xbf16, #tpu.memory_space<vmem>>, vector<128x128xbf16>
    %cst_7 = arith.constant dense<0.000000e+00> : vector<256x128xf32>
    %14 = tpu.matmul %12, %13, %cst_7 {dimension_numbers = #tpu.dot_dimension_numbers<[1], [0], [0], [1], [0, 0, 1, 1], [], []>} : vector<256x128xbf16>, vector<128x128xbf16>, vector<256x128xf32> -> vector<256x128xf32>
    %15 = arith.truncf %14 : vector<256x128xf32> to vector<256x128xbf16>
    %c0_8 = arith.constant 0 : index
    %c0_9 = arith.constant 0 : index
    %16 = vector.load %arg5[%c0_8, %c0_9] : memref<256x128xbf16, #tpu.memory_space<vmem>>, vector<256x128xbf16>
    tpu.vector_store %arg5[%c0_8, %c0_9], %15 {strides = array<i32>} : memref<256x128xbf16, #tpu.memory_space<vmem>>, vector<256x128xbf16>,
    return
  }
  func.func @transform_0(%arg0: i32) -> (i32, i32) {
    %c0_i32 = arith.constant 0 : i32
    %c0_i32_0 = arith.constant 0 : i32
    return %arg0, %c0_i32 : i32, i32
  }
  func.func @transform_1(%arg0: i32) -> (i32, i32) {
    %c0_i32 = arith.constant 0 : i32
    %c0_i32_0 = arith.constant 0 : i32
    %c0_i32_1 = arith.constant 0 : i32
    return %c0_i32, %c0_i32_0 : i32, i32
  }
  func.func @transform_2(%arg0: i32) -> (i32, i32) {
    %c0_i32 = arith.constant 0 : i32
    %c0_i32_0 = arith.constant 0 : i32
    %c0_i32_1 = arith.constant 0 : i32
    return %c0_i32, %c0_i32_0 : i32, i32
  }
  func.func @transform_3(%arg0: i32) -> (i32, i32) {
    %c0_i32 = arith.constant 0 : i32
    %c0_i32_0 = arith.constant 0 : i32
    %c0_i32_1 = arith.constant 0 : i32
    return %c0_i32, %c0_i32_0 : i32, i32
  }
  func.func @transform_4(%arg0: i32) -> (i32, i32) {
    %c0_i32 = arith.constant 0 : i32
    %c0_i32_0 = arith.constant 0 : i32
    return %arg0, %c0_i32 : i32, i32
  }
}

module attributes {stable_mosaic.version = 11 : i64} {
  func.func @_bn_sig_pool_kernel(%arg0: i32, %arg1: memref<256x128xf32, #tpu.memory_space<vmem>>, %arg2: memref<1x128xf32, #tpu.memory_space<vmem>>, %arg3: memref<1x128xf32, #tpu.memory_space<vmem>>, %arg4: memref<2x256xbf16, #tpu.memory_space<vmem>>, %arg5: memref<2x1xf32, #tpu.memory_space<vmem>>, %arg6: memref<2x128xf32, #tpu.memory_space<vmem>>) attributes {dimension_semantics = [#tpu.dimension_semantics<arbitrary>], iteration_bounds = array<i64: 1>, scalar_prefetch = 0 : i64, scratch_operands = 0 : i64, tpu.core_type = #tpu.core_type<tc>, window_params = [{transform_indices = @transform_0, window_bounds = array<i64: 256, 128>}, {pipeline_mode = #tpu.pipeline_mode<synchronous>, transform_indices = @transform_1, window_bounds = array<i64: 1, 128>}, {pipeline_mode = #tpu.pipeline_mode<synchronous>, transform_indices = @transform_2, window_bounds = array<i64: 1, 128>}, {transform_indices = @transform_3, window_bounds = array<i64: 2, 256>}, {pipeline_mode = #tpu.pipeline_mode<synchronous>, transform_indices = @transform_4, window_bounds = array<i64: 2, 1>}, {pipeline_mode = #tpu.pipeline_mode<synchronous>, transform_indices = @transform_5, window_bounds = array<i64: 2, 128>}]} {
    %c0_i32 = arith.constant 0 : i32
    %0 = arith.cmpi eq, %arg0, %c0_i32 : i32
    %1 = arith.extui %0 : i1 to i32
    %c0_i32_0 = arith.constant 0 : i32
    %2 = arith.cmpi ne, %1, %c0_i32_0 : i32
    scf.if %2 {
      %cst_15 = arith.constant 0.000000e+00 : f32
      %24 = vector.broadcast %cst_15 : f32 to vector<2x128xf32>
      %c0_16 = arith.constant 0 : index
      %c0_17 = arith.constant 0 : index
      %25 = vector.load %arg6[%c0_16, %c0_17] : memref<2x128xf32, #tpu.memory_space<vmem>>, vector<2x128xf32>
      tpu.vector_store %arg6[%c0_16, %c0_17], %24 {strides = array<i32>} : memref<2x128xf32, #tpu.memory_space<vmem>>, vector<2x128xf32>,
    } else {
    }
    %c0 = arith.constant 0 : index
    %c0_1 = arith.constant 0 : index
    %3 = vector.load %arg1[%c0, %c0_1] : memref<256x128xf32, #tpu.memory_space<vmem>>, vector<256x128xf32>
    %c0_2 = arith.constant 0 : index
    %c0_3 = arith.constant 0 : index
    %4 = vector.load %arg2[%c0_2, %c0_3] : memref<1x128xf32, #tpu.memory_space<vmem>>, vector<1x128xf32>
    %5 = vector.broadcast %4 : vector<1x128xf32> to vector<256x128xf32>
    %6 = arith.mulf %3, %5 : vector<256x128xf32>
    %c0_4 = arith.constant 0 : index
    %c0_5 = arith.constant 0 : index
    %7 = vector.load %arg3[%c0_4, %c0_5] : memref<1x128xf32, #tpu.memory_space<vmem>>, vector<1x128xf32>
    %8 = vector.broadcast %7 : vector<1x128xf32> to vector<256x128xf32>
    %9 = arith.addf %6, %8 : vector<256x128xf32>
    %10 = arith.negf %9 : vector<256x128xf32>
    %11 = math.exp %10 : vector<256x128xf32>
    %cst = arith.constant 1.000000e+00 : f32
    %12 = vector.broadcast %cst : f32 to vector<256x128xf32>
    %13 = arith.addf %12, %11 : vector<256x128xf32>
    %14 = arith.divf %12, %13 : vector<256x128xf32>
    %15 = arith.truncf %14 : vector<256x128xf32> to vector<256x128xbf16>
    %c0_6 = arith.constant 0 : index
    %c0_7 = arith.constant 0 : index
    %16 = vector.load %arg6[%c0_6, %c0_7] : memref<2x128xf32, #tpu.memory_space<vmem>>, vector<2x128xf32>
    %c0_8 = arith.constant 0 : index
    %c0_9 = arith.constant 0 : index
    %17 = vector.load %arg4[%c0_8, %c0_9] : memref<2x256xbf16, #tpu.memory_space<vmem>>, vector<2x256xbf16>
    %cst_10 = arith.constant dense<0.000000e+00> : vector<2x128xf32>
    %18 = tpu.matmul %17, %15, %cst_10 {dimension_numbers = #tpu.dot_dimension_numbers<[1], [0], [0], [1], [0, 0, 1, 1], [], []>} : vector<2x256xbf16>, vector<256x128xbf16>, vector<2x128xf32> -> vector<2x128xf32>
    %19 = arith.addf %16, %18 : vector<2x128xf32>
    %c0_11 = arith.constant 0 : index
    %c0_12 = arith.constant 0 : index
    %20 = vector.load %arg6[%c0_11, %c0_12] : memref<2x128xf32, #tpu.memory_space<vmem>>, vector<2x128xf32>
    tpu.vector_store %arg6[%c0_11, %c0_12], %19 {strides = array<i32>} : memref<2x128xf32, #tpu.memory_space<vmem>>, vector<2x128xf32>,
    %c0_i32_13 = arith.constant 0 : i32
    %21 = arith.cmpi eq, %arg0, %c0_i32_13 : i32
    %22 = arith.extui %21 : i1 to i32
    %c0_i32_14 = arith.constant 0 : i32
    %23 = arith.cmpi ne, %22, %c0_i32_14 : i32
    scf.if %23 {
      %c0_15 = arith.constant 0 : index
      %c0_16 = arith.constant 0 : index
      %24 = vector.load %arg6[%c0_15, %c0_16] : memref<2x128xf32, #tpu.memory_space<vmem>>, vector<2x128xf32>
      %c0_17 = arith.constant 0 : index
      %c0_18 = arith.constant 0 : index
      %25 = vector.load %arg5[%c0_17, %c0_18] : memref<2x1xf32, #tpu.memory_space<vmem>>, vector<2x1xf32>
      %26 = vector.broadcast %25 : vector<2x1xf32> to vector<2x128xf32>
      %27 = arith.mulf %24, %26 : vector<2x128xf32>
      %c0_19 = arith.constant 0 : index
      %c0_20 = arith.constant 0 : index
      %28 = vector.load %arg6[%c0_19, %c0_20] : memref<2x128xf32, #tpu.memory_space<vmem>>, vector<2x128xf32>
      tpu.vector_store %arg6[%c0_19, %c0_20], %27 {strides = array<i32>} : memref<2x128xf32, #tpu.memory_space<vmem>>, vector<2x128xf32>,
    } else {
    }
    return
  }
  func.func @transform_0(%arg0: i32) -> (i32, i32) {
    %c0_i32 = arith.constant 0 : i32
    %c0_i32_0 = arith.constant 0 : i32
    return %arg0, %c0_i32 : i32, i32
  }
  func.func @transform_1(%arg0: i32) -> (i32, i32) {
    %c0_i32 = arith.constant 0 : i32
    %c0_i32_0 = arith.constant 0 : i32
    %c0_i32_1 = arith.constant 0 : i32
    return %c0_i32, %c0_i32_0 : i32, i32
  }
  func.func @transform_2(%arg0: i32) -> (i32, i32) {
    %c0_i32 = arith.constant 0 : i32
    %c0_i32_0 = arith.constant 0 : i32
    %c0_i32_1 = arith.constant 0 : i32
    return %c0_i32, %c0_i32_0 : i32, i32
  }
  func.func @transform_3(%arg0: i32) -> (i32, i32) {
    %c0_i32 = arith.constant 0 : i32
    %c0_i32_0 = arith.constant 0 : i32
    return %c0_i32, %arg0 : i32, i32
  }
  func.func @transform_4(%arg0: i32) -> (i32, i32) {
    %c0_i32 = arith.constant 0 : i32
    %c0_i32_0 = arith.constant 0 : i32
    %c0_i32_1 = arith.constant 0 : i32
    return %c0_i32, %c0_i32_0 : i32, i32
  }
  func.func @transform_5(%arg0: i32) -> (i32, i32) {
    %c0_i32 = arith.constant 0 : i32
    %c0_i32_0 = arith.constant 0 : i32
    %c0_i32_1 = arith.constant 0 : i32
    return %c0_i32, %c0_i32_0 : i32, i32
  }
}

</mosaic_0001>

<llo_original>
// kernel: cgcnn_encoder_forward.6
$region0: #{cgcnn_encoder_forward.6}
  #allocation0 [shape = 'u32[]', space=smem, size = 0x4, offset = 0x4, fixed_abs, tag = 'smem constant byte address 0x4 - core index']
  #allocation1 [shape = 'u32[144,128]{1,0:T(1,128)}', space=vmem, size = 0x12000, scoped, tag = 'internal scratch']
  %s0 = inlined_call_operand.vmem [shape: bf16[256,256], index: 0, kind: input, shape index: {}]
  %s1 = inlined_call_operand.vmem [shape: bf16[256,128], index: 1, kind: input, shape index: {}]
  %s2 = inlined_call_operand.vmem [shape: f32[256,128], index: 2, kind: output, shape index: {}]
  %s3 = sld [smem:[#allocation0]]
  $region22: #{cgcnn_encoder_forward.6} parent=0
    _
  %s5 = ssub.s32 1, %s3
  %s6 = scalar_select 0, %s5, %s3
  // Predicated region
  $region2: #{cgcnn_encoder_forward.6} parent=0 // pred_check
    _
  $region3: #{cgcnn_encoder_forward.6} parent=0 // pred_check_branch
    %8 = sbr.rel (0) target = $region5
  $region4: #{cgcnn_encoder_forward.6} parent=0 // pred_region
    _
  $region5: #{cgcnn_encoder_forward.6} parent=0 // pred_fallthru
    _
  // Predicated region
  $region6: #{cgcnn_encoder_forward.6} parent=0 // pred_check
    _
  $region7: #{cgcnn_encoder_forward.6} parent=0 // pred_check_branch
    %10 = sbr.rel (0) target = $region9
  $region8: #{cgcnn_encoder_forward.6} parent=0 // pred_region
    _
  $region9: #{cgcnn_encoder_forward.6} parent=0 // pred_fallthru
    _
  %p12 = scmp.eq.s32.totalorder 0, 0
  // Predicated region
  $region10: #{cgcnn_encoder_forward.6} parent=0 // pred_check
    %p13 = pneg %p12
  $region11: #{cgcnn_encoder_forward.6} parent=0 // pred_check_branch
    %15 = sbr.rel (%p13) target = $region13
  $region12: #{cgcnn_encoder_forward.6} parent=0 // pred_region
    %16 = vst [vmem:[%s2] sm:$0xff] 0.0
    %17 = vst [vmem:[%s2 + $0x8] sm:$0xff] 0.0
    %18 = vst [vmem:[%s2 + $0x10] sm:$0xff] 0.0
    %19 = vst [vmem:[%s2 + $0x18] sm:$0xff] 0.0
    %20 = vst [vmem:[%s2 + $0x20] sm:$0xff] 0.0
    %21 = vst [vmem:[%s2 + $0x28] sm:$0xff] 0.0
    %22 = vst [vmem:[%s2 + $0x30] sm:$0xff] 0.0
    %23 = vst [vmem:[%s2 + $0x38] sm:$0xff] 0.0
    %24 = vst [vmem:[%s2 + $0x40] sm:$0xff] 0.0
    %25 = vst [vmem:[%s2 + $0x48] sm:$0xff] 0.0
    %26 = vst [vmem:[%s2 + $0x50] sm:$0xff] 0.0
    %27 = vst [vmem:[%s2 + $0x58] sm:$0xff] 0.0
    %28 = vst [vmem:[%s2 + $0x60] sm:$0xff] 0.0
    %29 = vst [vmem:[%s2 + $0x68] sm:$0xff] 0.0
    %30 = vst [vmem:[%s2 + $0x70] sm:$0xff] 0.0
    %31 = vst [vmem:[%s2 + $0x78] sm:$0xff] 0.0
    %32 = vst [vmem:[%s2 + $0x80] sm:$0xff] 0.0
    %33 = vst [vmem:[%s2 + $0x88] sm:$0xff] 0.0
    %34 = vst [vmem:[%s2 + $0x90] sm:$0xff] 0.0
    %35 = vst [vmem:[%s2 + $0x98] sm:$0xff] 0.0
    %36 = vst [vmem:[%s2 + $0xa0] sm:$0xff] 0.0
    %37 = vst [vmem:[%s2 + $0xa8] sm:$0xff] 0.0
    %38 = vst [vmem:[%s2 + $0xb0] sm:$0xff] 0.0
    %39 = vst [vmem:[%s2 + $0xb8] sm:$0xff] 0.0
    %40 = vst [vmem:[%s2 + $0xc0] sm:$0xff] 0.0
    %41 = vst [vmem:[%s2 + $0xc8] sm:$0xff] 0.0
    %42 = vst [vmem:[%s2 + $0xd0] sm:$0xff] 0.0
    %43 = vst [vmem:[%s2 + $0xd8] sm:$0xff] 0.0
    %44 = vst [vmem:[%s2 + $0xe0] sm:$0xff] 0.0
    %45 = vst [vmem:[%s2 + $0xe8] sm:$0xff] 0.0
    %46 = vst [vmem:[%s2 + $0xf0] sm:$0xff] 0.0
    %47 = vst [vmem:[%s2 + $0xf8] sm:$0xff] 0.0
  $region13: #{cgcnn_encoder_forward.6} parent=0 // pred_fallthru
    _
  %v48 = vld [vmem:[%s2] sm:$0xff]
  %v49 = vld [vmem:[%s2 + $0x8] sm:$0xff]
  %v50 = vld [vmem:[%s2 + $0x10] sm:$0xff]
  %v51 = vld [vmem:[%s2 + $0x18] sm:$0xff]
  %v52 = vld [vmem:[%s2 + $0x20] sm:$0xff]
  %v53 = vld [vmem:[%s2 + $0x28] sm:$0xff]
  %v54 = vld [vmem:[%s2 + $0x30] sm:$0xff]
  %v55 = vld [vmem:[%s2 + $0x38] sm:$0xff]
  %v56 = vld [vmem:[%s2 + $0x40] sm:$0xff]
  %v57 = vld [vmem:[%s2 + $0x48] sm:$0xff]
  %v58 = vld [vmem:[%s2 + $0x50] sm:$0xff]
  %v59 = vld [vmem:[%s2 + $0x58] sm:$0xff]
  %v60 = vld [vmem:[%s2 + $0x60] sm:$0xff]
  %v61 = vld [vmem:[%s2 + $0x68] sm:$0xff]
  %v62 = vld [vmem:[%s2 + $0x70] sm:$0xff]
  %v63 = vld [vmem:[%s2 + $0x78] sm:$0xff]
  %v64 = vld [vmem:[%s2 + $0x80] sm:$0xff]
  %v65 = vld [vmem:[%s2 + $0x88] sm:$0xff]
  %v66 = vld [vmem:[%s2 + $0x90] sm:$0xff]
  %v67 = vld [vmem:[%s2 + $0x98] sm:$0xff]
  %v68 = vld [vmem:[%s2 + $0xa0] sm:$0xff]
  %v69 = vld [vmem:[%s2 + $0xa8] sm:$0xff]
  %v70 = vld [vmem:[%s2 + $0xb0] sm:$0xff]
  %v71 = vld [vmem:[%s2 + $0xb8] sm:$0xff]
  %v72 = vld [vmem:[%s2 + $0xc0] sm:$0xff]
  %v73 = vld [vmem:[%s2 + $0xc8] sm:$0xff]
  %v74 = vld [vmem:[%s2 + $0xd0] sm:$0xff]
  %v75 = vld [vmem:[%s2 + $0xd8] sm:$0xff]
  %v76 = vld [vmem:[%s2 + $0xe0] sm:$0xff]
  %v77 = vld [vmem:[%s2 + $0xe8] sm:$0xff]
  %v78 = vld [vmem:[%s2 + $0xf0] sm:$0xff]
  %v79 = vld [vmem:[%s2 + $0xf8] sm:$0xff]
  %v80 = vld [vmem:[%s0] sm:$0xff]
  %v81 = vld [vmem:[%s0 + $0x8] sm:$0xff]
  %v82 = vld [vmem:[%s0 + $0x10] sm:$0xff]
  %v83 = vld [vmem:[%s0 + $0x18] sm:$0xff]
  %v84 = vld [vmem:[%s0 + $0x20] sm:$0xff]
  %v85 = vld [vmem:[%s0 + $0x28] sm:$0xff]
  %v86 = vld [vmem:[%s0 + $0x30] sm:$0xff]
  %v87 = vld [vmem:[%s0 + $0x38] sm:$0xff]
  %v88 = vld [vmem:[%s0 + $0x40] sm:$0xff]
  %v89 = vld [vmem:[%s0 + $0x48] sm:$0xff]
  %v90 = vld [vmem:[%s0 + $0x50] sm:$0xff]
  %v91 = vld [vmem:[%s0 + $0x58] sm:$0xff]
  %v92 = vld [vmem:[%s0 + $0x60] sm:$0xff]
  %v93 = vld [vmem:[%s0 + $0x68] sm:$0xff]
  %v94 = vld [vmem:[%s0 + $0x70] sm:$0xff]
  %v95 = vld [vmem:[%s0 + $0x78] sm:$0xff]
  %v96 = vld [vmem:[%s0 + $0x80] sm:$0xff]
  %v97 = vld [vmem:[%s0 + $0x88] sm:$0xff]
  %v98 = vld [vmem:[%s0 + $0x90] sm:$0xff]
  %v99 = vld [vmem:[%s0 + $0x98] sm:$0xff]
  %v100 = vld [vmem:[%s0 + $0xa0] sm:$0xff]
  %v101 = vld [vmem:[%s0 + $0xa8] sm:$0xff]
  %v102 = vld [vmem:[%s0 + $0xb0] sm:$0xff]
  %v103 = vld [vmem:[%s0 + $0xb8] sm:$0xff]
  %v104 = vld [vmem:[%s0 + $0xc0] sm:$0xff]
  %v105 = vld [vmem:[%s0 + $0xc8] sm:$0xff]
  %v106 = vld [vmem:[%s0 + $0xd0] sm:$0xff]
  %v107 = vld [vmem:[%s0 + $0xd8] sm:$0xff]
  %v108 = vld [vmem:[%s0 + $0xe0] sm:$0xff]
  %v109 = vld [vmem:[%s0 + $0xe8] sm:$0xff]
  %v110 = vld [vmem:[%s0 + $0xf0] sm:$0xff]
  %v111 = vld [vmem:[%s0 + $0xf8] sm:$0xff]
  %v112 = vld [vmem:[%s1] sm:$0xf]
  %v113 = vld [vmem:[%s1 + $0x4] sm:$0xf]
  %v114 = vld [vmem:[%s1 + $0x8] sm:$0xf]
  %v115 = vld [vmem:[%s1 + $0xc] sm:$0xf]
  %v116 = vld [vmem:[%s1 + $0x10] sm:$0xf]
  %v117 = vld [vmem:[%s1 + $0x14] sm:$0xf]
  %v118 = vld [vmem:[%s1 + $0x18] sm:$0xf]
  %v119 = vld [vmem:[%s1 + $0x1c] sm:$0xf]
  %v120 = vld [vmem:[%s1 + $0x20] sm:$0xf]
  %v121 = vld [vmem:[%s1 + $0x24] sm:$0xf]
  %v122 = vld [vmem:[%s1 + $0x28] sm:$0xf]
  %v123 = vld [vmem:[%s1 + $0x2c] sm:$0xf]
  %v124 = vld [vmem:[%s1 + $0x30] sm:$0xf]
  %v125 = vld [vmem:[%s1 + $0x34] sm:$0xf]
  %v126 = vld [vmem:[%s1 + $0x38] sm:$0xf]
  %v127 = vld [vmem:[%s1 + $0x3c] sm:$0xf]
  %v128 = vld [vmem:[%s1 + $0x40] sm:$0xf]
  %v129 = vld [vmem:[%s1 + $0x44] sm:$0xf]
  %v130 = vld [vmem:[%s1 + $0x48] sm:$0xf]
  %v131 = vld [vmem:[%s1 + $0x4c] sm:$0xf]
  %v132 = vld [vmem:[%s1 + $0x50] sm:$0xf]
  %v133 = vld [vmem:[%s1 + $0x54] sm:$0xf]
  %v134 = vld [vmem:[%s1 + $0x58] sm:$0xf]
  %v135 = vld [vmem:[%s1 + $0x5c] sm:$0xf]
  %v136 = vld [vmem:[%s1 + $0x60] sm:$0xf]
  %v137 = vld [vmem:[%s1 + $0x64] sm:$0xf]
  %v138 = vld [vmem:[%s1 + $0x68] sm:$0xf]
  %v139 = vld [vmem:[%s1 + $0x6c] sm:$0xf]
  %v140 = vld [vmem:[%s1 + $0x70] sm:$0xf]
  %v141 = vld [vmem:[%s1 + $0x74] sm:$0xf]
  %v142 = vld [vmem:[%s1 + $0x78] sm:$0xf]
  %v143 = vld [vmem:[%s1 + $0x7c] sm:$0xf]
  %v176 = vunpack.c.l.b16 %v80
  %v177 = vunpack.c.h.b16 %v80
  %v178 = vunpack.c.l.b16 %v81
  %v179 = vunpack.c.h.b16 %v81
  %v180 = vunpack.c.l.b16 %v82
  %v181 = vunpack.c.h.b16 %v82
  %v182 = vunpack.c.l.b16 %v83
  %v183 = vunpack.c.h.b16 %v83
  %v184 = vunpack.c.l.b16 %v84
  %v185 = vunpack.c.h.b16 %v84
  %v186 = vunpack.c.l.b16 %v85
  %v187 = vunpack.c.h.b16 %v85
  %v188 = vunpack.c.l.b16 %v86
  %v189 = vunpack.c.h.b16 %v86
  %v190 = vunpack.c.l.b16 %v87
  %v191 = vunpack.c.h.b16 %v87
  %v192 = vunpack.c.l.b16 %v88
  %v193 = vunpack.c.h.b16 %v88
  %v194 = vunpack.c.l.b16 %v89
  %v195 = vunpack.c.h.b16 %v89
  %v196 = vunpack.c.l.b16 %v90
  %v197 = vunpack.c.h.b16 %v90
  %v198 = vunpack.c.l.b16 %v91
  %v199 = vunpack.c.h.b16 %v91
  %v200 = vunpack.c.l.b16 %v92
  %v201 = vunpack.c.h.b16 %v92
  %v202 = vunpack.c.l.b16 %v93
  %v203 = vunpack.c.h.b16 %v93
  %v204 = vunpack.c.l.b16 %v94
  %v205 = vunpack.c.h.b16 %v94
  %v206 = vunpack.c.l.b16 %v95
  %v207 = vunpack.c.h.b16 %v95
  %v208 = vunpack.c.l.b16 %v96
  %v209 = vunpack.c.h.b16 %v96
  %v210 = vunpack.c.l.b16 %v97
  %v211 = vunpack.c.h.b16 %v97
  %v212 = vunpack.c.l.b16 %v98
  %v213 = vunpack.c.h.b16 %v98
  %v214 = vunpack.c.l.b16 %v99
  %v215 = vunpack.c.h.b16 %v99
  %v216 = vunpack.c.l.b16 %v100
  %v217 = vunpack.c.h.b16 %v100
  %v218 = vunpack.c.l.b16 %v101
  %v219 = vunpack.c.h.b16 %v101
  %v220 = vunpack.c.l.b16 %v102
  %v221 = vunpack.c.h.b16 %v102
  %v222 = vunpack.c.l.b16 %v103
  %v223 = vunpack.c.h.b16 %v103
  %v224 = vunpack.c.l.b16 %v104
  %v225 = vunpack.c.h.b16 %v104
  %v226 = vunpack.c.l.b16 %v105
  %v227 = vunpack.c.h.b16 %v105
  %v228 = vunpack.c.l.b16 %v106
  %v229 = vunpack.c.h.b16 %v106
  %v230 = vunpack.c.l.b16 %v107
  %v231 = vunpack.c.h.b16 %v107
  %v232 = vunpack.c.l.b16 %v108
  %v233 = vunpack.c.h.b16 %v108
  %v234 = vunpack.c.l.b16 %v109
  %v235 = vunpack.c.h.b16 %v109
  %v236 = vunpack.c.l.b16 %v110
  %v237 = vunpack.c.h.b16 %v110
  %v238 = vunpack.c.l.b16 %v111
  %v239 = vunpack.c.h.b16 %v111
  %v240 = vpack.c.b16 %v178, %v176
  %v241 = vpack.c.b16 %v179, %v177
  %v242 = vpack.c.b16 %v182, %v180
  %v243 = vpack.c.b16 %v183, %v181
  %v244 = vpack.c.b16 %v186, %v184
  %v245 = vpack.c.b16 %v187, %v185
  %v246 = vpack.c.b16 %v190, %v188
  %v247 = vpack.c.b16 %v191, %v189
  %v248 = vpack.c.b16 %v194, %v192
  %v249 = vpack.c.b16 %v195, %v193
  %v250 = vpack.c.b16 %v198, %v196
  %v251 = vpack.c.b16 %v199, %v197
  %v252 = vpack.c.b16 %v202, %v200
  %v253 = vpack.c.b16 %v203, %v201
  %v254 = vpack.c.b16 %v206, %v204
  %v255 = vpack.c.b16 %v207, %v205
  %v256 = vpack.c.b16 %v210, %v208
  %v257 = vpack.c.b16 %v211, %v209
  %v258 = vpack.c.b16 %v214, %v212
  %v259 = vpack.c.b16 %v215, %v213
  %v260 = vpack.c.b16 %v218, %v216
  %v261 = vpack.c.b16 %v219, %v217
  %v262 = vpack.c.b16 %v222, %v220
  %v263 = vpack.c.b16 %v223, %v221
  %v264 = vpack.c.b16 %v226, %v224
  %v265 = vpack.c.b16 %v227, %v225
  %v266 = vpack.c.b16 %v230, %v228
  %v267 = vpack.c.b16 %v231, %v229
  %v268 = vpack.c.b16 %v234, %v232
  %v269 = vpack.c.b16 %v235, %v233
  %v270 = vpack.c.b16 %v238, %v236
  %v271 = vpack.c.b16 %v239, %v237
  %v336 = vunpack.c.l.b16 %v112
  %v337 = vunpack.c.l.b16 %v113
  %v338 = vunpack.c.l.b16 %v114
  %v339 = vunpack.c.l.b16 %v115
  %v340 = vunpack.c.l.b16 %v116
  %v341 = vunpack.c.l.b16 %v117
  %v342 = vunpack.c.l.b16 %v118
  %v343 = vunpack.c.l.b16 %v119
  %v344 = vunpack.c.l.b16 %v120
  %v345 = vunpack.c.l.b16 %v121
  %v346 = vunpack.c.l.b16 %v122
  %v347 = vunpack.c.l.b16 %v123
  %v348 = vunpack.c.l.b16 %v124
  %v349 = vunpack.c.l.b16 %v125
  %v350 = vunpack.c.l.b16 %v126
  %v351 = vunpack.c.l.b16 %v127
  %v352 = vunpack.c.l.b16 %v128
  %v353 = vunpack.c.l.b16 %v129
  %v354 = vunpack.c.l.b16 %v130
  %v355 = vunpack.c.l.b16 %v131
  %v356 = vunpack.c.l.b16 %v132
  %v357 = vunpack.c.l.b16 %v133
  %v358 = vunpack.c.l.b16 %v134
  %v359 = vunpack.c.l.b16 %v135
  %v360 = vunpack.c.l.b16 %v136
  %v361 = vunpack.c.l.b16 %v137
  %v362 = vunpack.c.l.b16 %v138
  %v363 = vunpack.c.l.b16 %v139
  %v364 = vunpack.c.l.b16 %v140
  %v365 = vunpack.c.l.b16 %v141
  %v366 = vunpack.c.l.b16 %v142
  %v367 = vunpack.c.l.b16 %v143
  %v368 = vpack.c.b16 %v337, %v336
  %v369 = vpack.c.b16 %v339, %v338
  %v370 = vpack.c.b16 %v341, %v340
  %v371 = vpack.c.b16 %v343, %v342
  %v372 = vpack.c.b16 %v345, %v344
  %v373 = vpack.c.b16 %v347, %v346
  %v374 = vpack.c.b16 %v349, %v348
  %v375 = vpack.c.b16 %v351, %v350
  %v376 = vpack.c.b16 %v353, %v352
  %v377 = vpack.c.b16 %v355, %v354
  %v378 = vpack.c.b16 %v357, %v356
  %v379 = vpack.c.b16 %v359, %v358
  %v380 = vpack.c.b16 %v361, %v360
  %v381 = vpack.c.b16 %v363, %v362
  %v382 = vpack.c.b16 %v365, %v364
  %v383 = vpack.c.b16 %v367, %v366
  %400 = vmatprep.subr.bf16.mxu0 0
  %401 = vmatpush1.bf16.msra.mxu0 %v375
  %402 = vmatprep.subr.bf16.mxu0 0
  %403 = vmatpush1.bf16.msra.mxu0 %v374
  %404 = vmatprep.subr.bf16.mxu0 0
  %405 = vmatpush1.bf16.msra.mxu0 %v373
  %406 = vmatprep.subr.bf16.mxu0 0
  %407 = vmatpush1.bf16.msra.mxu0 %v372
  %408 = vmatprep.subr.bf16.mxu0 0
  %409 = vmatpush1.bf16.msra.mxu0 %v371
  %410 = vmatprep.subr.bf16.mxu0 0
  %411 = vmatpush1.bf16.msra.mxu0 %v370
  %412 = vmatprep.subr.bf16.mxu0 0
  %413 = vmatpush1.bf16.msra.mxu0 %v369
  %414 = vmatprep.subr.bf16.mxu0 0
  %415 = vmatpush1.bf16.msra.mxu0 %v368
  %416 = vmatprep.subr.bf16.mxu0 0
  %417 = vmatpush2.bf16.msra.mxu0 %v383
  %418 = vmatprep.subr.bf16.mxu0 0
  %419 = vmatpush2.bf16.msra.mxu0 %v382
  %420 = vmatprep.subr.bf16.mxu0 0
  %421 = vmatpush2.bf16.msra.mxu0 %v381
  %422 = vmatprep.subr.bf16.mxu0 0
  %423 = vmatpush2.bf16.msra.mxu0 %v380
  %424 = vmatprep.subr.bf16.mxu0 0
  %425 = vmatpush2.bf16.msra.mxu0 %v379
  %426 = vmatprep.subr.bf16.mxu0 0
  %427 = vmatpush2.bf16.msra.mxu0 %v378
  %428 = vmatprep.subr.bf16.mxu0 0
  %429 = vmatpush2.bf16.msra.mxu0 %v377
  %430 = vmatprep.subr.bf16.mxu0 0
  %431 = vmatpush2.bf16.msra.mxu0 %v376
  %432 = vmatprep.mubr.bf16.mxu0 %v241
  %433 = vmatmul.mubr.bf16.gmra.mxu0 %v240
  %v434 = vpop.f32.mrf.mxu0
  %v435 = vadd.f32 0.0, %v434
  %v436 = vpop.f32.mrf.mxu0
  %v437 = vpop.f32.mrf.mxu0
  %v438 = vadd.f32 0.0, %v437
  %v439 = vpop.f32.mrf.mxu0
  %440 = vmatprep.mubr.bf16.mxu0 %v243
  %441 = vmatmul.mubr.bf16.gmra.mxu0 %v242
  %v442 = vpop.f32.mrf.mxu0
  %v443 = vadd.f32 0.0, %v442
  %v444 = vpop.f32.mrf.mxu0
  %v445 = vpop.f32.mrf.mxu0
  %v446 = vadd.f32 0.0, %v445
  %v447 = vpop.f32.mrf.mxu0
  %448 = vmatprep.mubr.bf16.mxu0 %v245
  %449 = vmatmul.mubr.bf16.gmra.mxu0 %v244
  %v450 = vpop.f32.mrf.mxu0
  %v451 = vadd.f32 0.0, %v450
  %v452 = vpop.f32.mrf.mxu0
  %v453 = vpop.f32.mrf.mxu0
  %v454 = vadd.f32 0.0, %v453
  %v455 = vpop.f32.mrf.mxu0
  %456 = vmatprep.mubr.bf16.mxu0 %v247
  %457 = vmatmul.mubr.bf16.gmra.mxu0 %v246
  %v458 = vpop.f32.mrf.mxu0
  %v459 = vadd.f32 0.0, %v458
  %v460 = vpop.f32.mrf.mxu0
  %v461 = vpop.f32.mrf.mxu0
  %v462 = vadd.f32 0.0, %v461
  %v463 = vpop.f32.mrf.mxu0
  %464 = vmatprep.mubr.bf16.mxu0 %v249
  %465 = vmatmul.mubr.bf16.gmra.mxu0 %v248
  %v466 = vpop.f32.mrf.mxu0
  %v467 = vadd.f32 0.0, %v466
  %v468 = vpop.f32.mrf.mxu0
  %v469 = vpop.f32.mrf.mxu0
  %v470 = vadd.f32 0.0, %v469
  %v471 = vpop.f32.mrf.mxu0
  %472 = vmatprep.mubr.bf16.mxu0 %v251
  %473 = vmatmul.mubr.bf16.gmra.mxu0 %v250
  %v474 = vpop.f32.mrf.mxu0
  %v475 = vadd.f32 0.0, %v474
  %v476 = vpop.f32.mrf.mxu0
  %v477 = vpop.f32.mrf.mxu0
  %v478 = vadd.f32 0.0, %v477
  %v479 = vpop.f32.mrf.mxu0
  %480 = vmatprep.mubr.bf16.mxu0 %v253
  %481 = vmatmul.mubr.bf16.gmra.mxu0 %v252
  %v482 = vpop.f32.mrf.mxu0
  %v483 = vadd.f32 0.0, %v482
  %v484 = vpop.f32.mrf.mxu0
  %v485 = vpop.f32.mrf.mxu0
  %v486 = vadd.f32 0.0, %v485
  %v487 = vpop.f32.mrf.mxu0
  %488 = vmatprep.mubr.bf16.mxu0 %v255
  %489 = vmatmul.mubr.bf16.gmra.mxu0 %v254
  %v490 = vpop.f32.mrf.mxu0
  %v491 = vadd.f32 0.0, %v490
  %v492 = vpop.f32.mrf.mxu0
  %v493 = vpop.f32.mrf.mxu0
  %v494 = vadd.f32 0.0, %v493
  %v495 = vpop.f32.mrf.mxu0
  %496 = vmatprep.mubr.bf16.mxu0 %v257
  %497 = vmatmul.mubr.bf16.gmra.mxu0 %v256
  %v498 = vpop.f32.mrf.mxu0
  %v499 = vadd.f32 0.0, %v498
  %v500 = vpop.f32.mrf.mxu0
  %v501 = vpop.f32.mrf.mxu0
  %v502 = vadd.f32 0.0, %v501
  %v503 = vpop.f32.mrf.mxu0
  %504 = vmatprep.mubr.bf16.mxu0 %v259
  %505 = vmatmul.mubr.bf16.gmra.mxu0 %v258
  %v506 = vpop.f32.mrf.mxu0
  %v507 = vadd.f32 0.0, %v506
  %v508 = vpop.f32.mrf.mxu0
  %v509 = vpop.f32.mrf.mxu0
  %v510 = vadd.f32 0.0, %v509
  %v511 = vpop.f32.mrf.mxu0
  %512 = vmatprep.mubr.bf16.mxu0 %v261
  %513 = vmatmul.mubr.bf16.gmra.mxu0 %v260
  %v514 = vpop.f32.mrf.mxu0
  %v515 = vadd.f32 0.0, %v514
  %v516 = vpop.f32.mrf.mxu0
  %v517 = vpop.f32.mrf.mxu0
  %v518 = vadd.f32 0.0, %v517
  %v519 = vpop.f32.mrf.mxu0
  %520 = vmatprep.mubr.bf16.mxu0 %v263
  %521 = vmatmul.mubr.bf16.gmra.mxu0 %v262
  %v522 = vpop.f32.mrf.mxu0
  %v523 = vadd.f32 0.0, %v522
  %v524 = vpop.f32.mrf.mxu0
  %v525 = vpop.f32.mrf.mxu0
  %v526 = vadd.f32 0.0, %v525
  %v527 = vpop.f32.mrf.mxu0
  %528 = vmatprep.mubr.bf16.mxu0 %v265
  %529 = vmatmul.mubr.bf16.gmra.mxu0 %v264
  %v530 = vpop.f32.mrf.mxu0
  %v531 = vadd.f32 0.0, %v530
  %v532 = vpop.f32.mrf.mxu0
  %v533 = vpop.f32.mrf.mxu0
  %v534 = vadd.f32 0.0, %v533
  %v535 = vpop.f32.mrf.mxu0
  %536 = vmatprep.mubr.bf16.mxu0 %v267
  %537 = vmatmul.mubr.bf16.gmra.mxu0 %v266
  %v538 = vpop.f32.mrf.mxu0
  %v539 = vadd.f32 0.0, %v538
  %v540 = vpop.f32.mrf.mxu0
  %v541 = vpop.f32.mrf.mxu0
  %v542 = vadd.f32 0.0, %v541
  %v543 = vpop.f32.mrf.mxu0
  %544 = vmatprep.mubr.bf16.mxu0 %v269
  %545 = vmatmul.mubr.bf16.gmra.mxu0 %v268
  %v546 = vpop.f32.mrf.mxu0
  %v547 = vadd.f32 0.0, %v546
  %v548 = vpop.f32.mrf.mxu0
  %v549 = vpop.f32.mrf.mxu0
  %v550 = vadd.f32 0.0, %v549
  %v551 = vpop.f32.mrf.mxu0
  %552 = vmatprep.mubr.bf16.mxu0 %v271
  %553 = vmatmul.mubr.bf16.gmra.mxu0 %v270
  %v554 = vpop.f32.mrf.mxu0
  %v555 = vadd.f32 0.0, %v554
  %v556 = vpop.f32.mrf.mxu0
  %v557 = vpop.f32.mrf.mxu0
  %v558 = vadd.f32 0.0, %v557
  %v559 = vpop.f32.mrf.mxu0
  %560 = vdwg.mxu0
  %v561 = vadd.f32 %v48, %v435
  %v562 = vadd.f32 %v49, %v438
  %v563 = vadd.f32 %v50, %v443
  %v564 = vadd.f32 %v51, %v446
  %v565 = vadd.f32 %v52, %v451
  %v566 = vadd.f32 %v53, %v454
  %v567 = vadd.f32 %v54, %v459
  %v568 = vadd.f32 %v55, %v462
  %v569 = vadd.f32 %v56, %v467
  %v570 = vadd.f32 %v57, %v470
  %v571 = vadd.f32 %v58, %v475
  %v572 = vadd.f32 %v59, %v478
  %v573 = vadd.f32 %v60, %v483
  %v574 = vadd.f32 %v61, %v486
  %v575 = vadd.f32 %v62, %v491
  %v576 = vadd.f32 %v63, %v494
  %v577 = vadd.f32 %v64, %v499
  %v578 = vadd.f32 %v65, %v502
  %v579 = vadd.f32 %v66, %v507
  %v580 = vadd.f32 %v67, %v510
  %v581 = vadd.f32 %v68, %v515
  %v582 = vadd.f32 %v69, %v518
  %v583 = vadd.f32 %v70, %v523
  %v584 = vadd.f32 %v71, %v526
  %v585 = vadd.f32 %v72, %v531
  %v586 = vadd.f32 %v73, %v534
  %v587 = vadd.f32 %v74, %v539
  %v588 = vadd.f32 %v75, %v542
  %v589 = vadd.f32 %v76, %v547
  %v590 = vadd.f32 %v77, %v550
  %v591 = vadd.f32 %v78, %v555
  %v592 = vadd.f32 %v79, %v558
  %593 = vst [vmem:[%s2] sm:$0xff] %v561
  %594 = vst [vmem:[%s2 + $0x8] sm:$0xff] %v562
  %595 = vst [vmem:[%s2 + $0x10] sm:$0xff] %v563
  %596 = vst [vmem:[%s2 + $0x18] sm:$0xff] %v564
  %597 = vst [vmem:[%s2 + $0x20] sm:$0xff] %v565
  %598 = vst [vmem:[%s2 + $0x28] sm:$0xff] %v566
  %599 = vst [vmem:[%s2 + $0x30] sm:$0xff] %v567
  %600 = vst [vmem:[%s2 + $0x38] sm:$0xff] %v568
  %601 = vst [vmem:[%s2 + $0x40] sm:$0xff] %v569
  %602 = vst [vmem:[%s2 + $0x48] sm:$0xff] %v570
  %603 = vst [vmem:[%s2 + $0x50] sm:$0xff] %v571
  %604 = vst [vmem:[%s2 + $0x58] sm:$0xff] %v572
  %605 = vst [vmem:[%s2 + $0x60] sm:$0xff] %v573
  %606 = vst [vmem:[%s2 + $0x68] sm:$0xff] %v574
  %607 = vst [vmem:[%s2 + $0x70] sm:$0xff] %v575
  %608 = vst [vmem:[%s2 + $0x78] sm:$0xff] %v576
  %609 = vst [vmem:[%s2 + $0x80] sm:$0xff] %v577
  %610 = vst [vmem:[%s2 + $0x88] sm:$0xff] %v578
  %611 = vst [vmem:[%s2 + $0x90] sm:$0xff] %v579
  %612 = vst [vmem:[%s2 + $0x98] sm:$0xff] %v580
  %613 = vst [vmem:[%s2 + $0xa0] sm:$0xff] %v581
  %614 = vst [vmem:[%s2 + $0xa8] sm:$0xff] %v582
  %615 = vst [vmem:[%s2 + $0xb0] sm:$0xff] %v583
  %616 = vst [vmem:[%s2 + $0xb8] sm:$0xff] %v584
  %617 = vst [vmem:[%s2 + $0xc0] sm:$0xff] %v585
  %618 = vst [vmem:[%s2 + $0xc8] sm:$0xff] %v586
  %619 = vst [vmem:[%s2 + $0xd0] sm:$0xff] %v587
  %620 = vst [vmem:[%s2 + $0xd8] sm:$0xff] %v588
  %621 = vst [vmem:[%s2 + $0xe0] sm:$0xff] %v589
  %622 = vst [vmem:[%s2 + $0xe8] sm:$0xff] %v590
  %623 = vst [vmem:[%s2 + $0xf0] sm:$0xff] %v591
  %624 = vst [vmem:[%s2 + $0xf8] sm:$0xff] %v592
  // Predicated region
  $region14: #{cgcnn_encoder_forward.6} parent=0 // pred_check
    _
  $region15: #{cgcnn_encoder_forward.6} parent=0 // pred_check_branch
    %626 = sbr.rel (0) target = $region17
  $region16: #{cgcnn_encoder_forward.6} parent=0 // pred_region
    _
  $region17: #{cgcnn_encoder_forward.6} parent=0 // pred_fallthru
    _
  // Predicated region
  $region18: #{cgcnn_encoder_forward.6} parent=0 // pred_check
    _
  $region19: #{cgcnn_encoder_forward.6} parent=0 // pred_check_branch
    %628 = sbr.rel (0) target = $region21
  $region20: #{cgcnn_encoder_forward.6} parent=0 // pred_region
    _
  $region21: #{cgcnn_encoder_forward.6} parent=0 // pred_fallthru
    _

// kernel: cgcnn_encoder_forward.7
$region0: #{cgcnn_encoder_forward.7}
  #allocation0 [shape = 'u32[]', space=smem, size = 0x4, offset = 0x4, fixed_abs, tag = 'smem constant byte address 0x4 - core index']
  #allocation1 [shape = 'u32[144,128]{1,0:T(1,128)}', space=vmem, size = 0x12000, scoped, tag = 'internal scratch']
  %s0 = inlined_call_operand.vmem [shape: f32[256,128], index: 0, kind: input, shape index: {}]
  %s1 = inlined_call_operand.vmem [shape: f32[1,128], index: 1, kind: input, shape index: {}]
  %s2 = inlined_call_operand.vmem [shape: f32[1,128], index: 2, kind: input, shape index: {}]
  %s3 = inlined_call_operand.vmem [shape: bf16[128,128], index: 3, kind: input, shape index: {}]
  %s4 = inlined_call_operand.vmem [shape: bf16[256,128], index: 4, kind: output, shape index: {}]
  %s5 = sld [smem:[#allocation0]]
  $region26: #{cgcnn_encoder_forward.7} parent=0
    _
  %s7 = ssub.s32 1, %s5
  %s8 = scalar_select 0, %s7, %s5
  // Predicated region
  $region2: #{cgcnn_encoder_forward.7} parent=0 // pred_check
    _
  $region3: #{cgcnn_encoder_forward.7} parent=0 // pred_check_branch
    %10 = sbr.rel (0) target = $region5
  $region4: #{cgcnn_encoder_forward.7} parent=0 // pred_region
    _
  $region5: #{cgcnn_encoder_forward.7} parent=0 // pred_fallthru
    _
  // Predicated region
  $region6: #{cgcnn_encoder_forward.7} parent=0 // pred_check
    _
  $region7: #{cgcnn_encoder_forward.7} parent=0 // pred_check_branch
    %12 = sbr.rel (0) target = $region9
  $region8: #{cgcnn_encoder_forward.7} parent=0 // pred_region
    _
  $region9: #{cgcnn_encoder_forward.7} parent=0 // pred_fallthru
    _
  // Predicated region
  $region10: #{cgcnn_encoder_forward.7} parent=0 // pred_check
    _
  $region11: #{cgcnn_encoder_forward.7} parent=0 // pred_check_branch
    %14 = sbr.rel (0) target = $region13
  $region12: #{cgcnn_encoder_forward.7} parent=0 // pred_region
    _
  $region13: #{cgcnn_encoder_forward.7} parent=0 // pred_fallthru
    _
  // Predicated region
  $region14: #{cgcnn_encoder_forward.7} parent=0 // pred_check
    _
  $region15: #{cgcnn_encoder_forward.7} parent=0 // pred_check_branch
    %16 = sbr.rel (0) target = $region17
  $region16: #{cgcnn_encoder_forward.7} parent=0 // pred_region
    _
  $region17: #{cgcnn_encoder_forward.7} parent=0 // pred_fallthru
    _
  %v18 = vld [vmem:[%s0] sm:$0xff]
  %v19 = vld [vmem:[%s0 + $0x8] sm:$0xff]
  %v20 = vld [vmem:[%s0 + $0x10] sm:$0xff]
  %v21 = vld [vmem:[%s0 + $0x18] sm:$0xff]
  %v22 = vld [vmem:[%s0 + $0x20] sm:$0xff]
  %v23 = vld [vmem:[%s0 + $0x28] sm:$0xff]
  %v24 = vld [vmem:[%s0 + $0x30] sm:$0xff]
  %v25 = vld [vmem:[%s0 + $0x38] sm:$0xff]
  %v26 = vld [vmem:[%s0 + $0x40] sm:$0xff]
  %v27 = vld [vmem:[%s0 + $0x48] sm:$0xff]
  %v28 = vld [vmem:[%s0 + $0x50] sm:$0xff]
  %v29 = vld [vmem:[%s0 + $0x58] sm:$0xff]
  %v30 = vld [vmem:[%s0 + $0x60] sm:$0xff]
  %v31 = vld [vmem:[%s0 + $0x68] sm:$0xff]
  %v32 = vld [vmem:[%s0 + $0x70] sm:$0xff]
  %v33 = vld [vmem:[%s0 + $0x78] sm:$0xff]
  %v34 = vld [vmem:[%s0 + $0x80] sm:$0xff]
  %v35 = vld [vmem:[%s0 + $0x88] sm:$0xff]
  %v36 = vld [vmem:[%s0 + $0x90] sm:$0xff]
  %v37 = vld [vmem:[%s0 + $0x98] sm:$0xff]
  %v38 = vld [vmem:[%s0 + $0xa0] sm:$0xff]
  %v39 = vld [vmem:[%s0 + $0xa8] sm:$0xff]
  %v40 = vld [vmem:[%s0 + $0xb0] sm:$0xff]
  %v41 = vld [vmem:[%s0 + $0xb8] sm:$0xff]
  %v42 = vld [vmem:[%s0 + $0xc0] sm:$0xff]
  %v43 = vld [vmem:[%s0 + $0xc8] sm:$0xff]
  %v44 = vld [vmem:[%s0 + $0xd0] sm:$0xff]
  %v45 = vld [vmem:[%s0 + $0xd8] sm:$0xff]
  %v46 = vld [vmem:[%s0 + $0xe0] sm:$0xff]
  %v47 = vld [vmem:[%s0 + $0xe8] sm:$0xff]
  %v48 = vld [vmem:[%s0 + $0xf0] sm:$0xff]
  %v49 = vld [vmem:[%s0 + $0xf8] sm:$0xff]
  %v50 = vld [vmem:[%s1] sm:$0x1]
  %v52 = vlaneseq
  %v53 = vshrl.u32 %v52, 7
  %v54 = vsub.s32 0, %v53
  %v55 = vrot.slane %v50, %v54
  %v57 = vmul.f32 %v18, %v55
  %v58 = vmul.f32 %v19, %v55
  %v59 = vmul.f32 %v20, %v55
  %v60 = vmul.f32 %v21, %v55
  %v61 = vmul.f32 %v22, %v55
  %v62 = vmul.f32 %v23, %v55
  %v63 = vmul.f32 %v24, %v55
  %v64 = vmul.f32 %v25, %v55
  %v65 = vmul.f32 %v26, %v55
  %v66 = vmul.f32 %v27, %v55
  %v67 = vmul.f32 %v28, %v55
  %v68 = vmul.f32 %v29, %v55
  %v69 = vmul.f32 %v30, %v55
  %v70 = vmul.f32 %v31, %v55
  %v71 = vmul.f32 %v32, %v55
  %v72 = vmul.f32 %v33, %v55
  %v73 = vmul.f32 %v34, %v55
  %v74 = vmul.f32 %v35, %v55
  %v75 = vmul.f32 %v36, %v55
  %v76 = vmul.f32 %v37, %v55
  %v77 = vmul.f32 %v38, %v55
  %v78 = vmul.f32 %v39, %v55
  %v79 = vmul.f32 %v40, %v55
  %v80 = vmul.f32 %v41, %v55
  %v81 = vmul.f32 %v42, %v55
  %v82 = vmul.f32 %v43, %v55
  %v83 = vmul.f32 %v44, %v55
  %v84 = vmul.f32 %v45, %v55
  %v85 = vmul.f32 %v46, %v55
  %v86 = vmul.f32 %v47, %v55
  %v87 = vmul.f32 %v48, %v55
  %v88 = vmul.f32 %v49, %v55
  %v89 = vld [vmem:[%s2] sm:$0x1]
  %v91 = vlaneseq
  %v92 = vshrl.u32 %v91, 7
  %v93 = vsub.s32 0, %v92
  %v94 = vrot.slane %v89, %v93
  %v96 = vadd.f32 %v57, %v94
  %v97 = vadd.f32 %v58, %v94
  %v98 = vadd.f32 %v59, %v94
  %v99 = vadd.f32 %v60, %v94
  %v100 = vadd.f32 %v61, %v94
  %v101 = vadd.f32 %v62, %v94
  %v102 = vadd.f32 %v63, %v94
  %v103 = vadd.f32 %v64, %v94
  %v104 = vadd.f32 %v65, %v94
  %v105 = vadd.f32 %v66, %v94
  %v106 = vadd.f32 %v67, %v94
  %v107 = vadd.f32 %v68, %v94
  %v108 = vadd.f32 %v69, %v94
  %v109 = vadd.f32 %v70, %v94
  %v110 = vadd.f32 %v71, %v94
  %v111 = vadd.f32 %v72, %v94
  %v112 = vadd.f32 %v73, %v94
  %v113 = vadd.f32 %v74, %v94
  %v114 = vadd.f32 %v75, %v94
  %v115 = vadd.f32 %v76, %v94
  %v116 = vadd.f32 %v77, %v94
  %v117 = vadd.f32 %v78, %v94
  %v118 = vadd.f32 %v79, %v94
  %v119 = vadd.f32 %v80, %v94
  %v120 = vadd.f32 %v81, %v94
  %v121 = vadd.f32 %v82, %v94
  %v122 = vadd.f32 %v83, %v94
  %v123 = vadd.f32 %v84, %v94
  %v124 = vadd.f32 %v85, %v94
  %v125 = vadd.f32 %v86, %v94
  %v126 = vadd.f32 %v87, %v94
  %v127 = vadd.f32 %v88, %v94
  %v128 = vxor.u32 %v96, 2147483648
  %v129 = vxor.u32 %v97, 2147483648
  %v130 = vxor.u32 %v98, 2147483648
  %v131 = vxor.u32 %v99, 2147483648
  %v132 = vxor.u32 %v100, 2147483648
  %v133 = vxor.u32 %v101, 2147483648
  %v134 = vxor.u32 %v102, 2147483648
  %v135 = vxor.u32 %v103, 2147483648
  %v136 = vxor.u32 %v104, 2147483648
  %v137 = vxor.u32 %v105, 2147483648
  %v138 = vxor.u32 %v106, 2147483648
  %v139 = vxor.u32 %v107, 2147483648
  %v140 = vxor.u32 %v108, 2147483648
  %v141 = vxor.u32 %v109, 2147483648
  %v142 = vxor.u32 %v110, 2147483648
  %v143 = vxor.u32 %v111, 2147483648
  %v144 = vxor.u32 %v112, 2147483648
  %v145 = vxor.u32 %v113, 2147483648
  %v146 = vxor.u32 %v114, 2147483648
  %v147 = vxor.u32 %v115, 2147483648
  %v148 = vxor.u32 %v116, 2147483648
  %v149 = vxor.u32 %v117, 2147483648
  %v150 = vxor.u32 %v118, 2147483648
  %v151 = vxor.u32 %v119, 2147483648
  %v152 = vxor.u32 %v120, 2147483648
  %v153 = vxor.u32 %v121, 2147483648
  %v154 = vxor.u32 %v122, 2147483648
  %v155 = vxor.u32 %v123, 2147483648
  %v156 = vxor.u32 %v124, 2147483648
  %v157 = vxor.u32 %v125, 2147483648
  %v158 = vxor.u32 %v126, 2147483648
  %v159 = vxor.u32 %v127, 2147483648
  %v160 = vmul.f32 %v128, 1.442695
  %v161 = vpow.pop %v160
  %v162 = vmul.f32 %v129, 1.442695
  %v163 = vpow.pop %v162
  %v164 = vmul.f32 %v130, 1.442695
  %v165 = vpow.pop %v164
  %v166 = vmul.f32 %v131, 1.442695
  %v167 = vpow.pop %v166
  %v168 = vmul.f32 %v132, 1.442695
  %v169 = vpow.pop %v168
  %v170 = vmul.f32 %v133, 1.442695
  %v171 = vpow.pop %v170
  %v172 = vmul.f32 %v134, 1.442695
  %v173 = vpow.pop %v172
  %v174 = vmul.f32 %v135, 1.442695
  %v175 = vpow.pop %v174
  %v176 = vmul.f32 %v136, 1.442695
  %v177 = vpow.pop %v176
  %v178 = vmul.f32 %v137, 1.442695
  %v179 = vpow.pop %v178
  %v180 = vmul.f32 %v138, 1.442695
  %v181 = vpow.pop %v180
  %v182 = vmul.f32 %v139, 1.442695
  %v183 = vpow.pop %v182
  %v184 = vmul.f32 %v140, 1.442695
  %v185 = vpow.pop %v184
  %v186 = vmul.f32 %v141, 1.442695
  %v187 = vpow.pop %v186
  %v188 = vmul.f32 %v142, 1.442695
  %v189 = vpow.pop %v188
  %v190 = vmul.f32 %v143, 1.442695
  %v191 = vpow.pop %v190
  %v192 = vmul.f32 %v144, 1.442695
  %v193 = vpow.pop %v192
  %v194 = vmul.f32 %v145, 1.442695
  %v195 = vpow.pop %v194
  %v196 = vmul.f32 %v146, 1.442695
  %v197 = vpow.pop %v196
  %v198 = vmul.f32 %v147, 1.442695
  %v199 = vpow.pop %v198
  %v200 = vmul.f32 %v148, 1.442695
  %v201 = vpow.pop %v200
  %v202 = vmul.f32 %v149, 1.442695
  %v203 = vpow.pop %v202
  %v204 = vmul.f32 %v150, 1.442695
  %v205 = vpow.pop %v204
  %v206 = vmul.f32 %v151, 1.442695
  %v207 = vpow.pop %v206
  %v208 = vmul.f32 %v152, 1.442695
  %v209 = vpow.pop %v208
  %v210 = vmul.f32 %v153, 1.442695
  %v211 = vpow.pop %v210
  %v212 = vmul.f32 %v154, 1.442695
  %v213 = vpow.pop %v212
  %v214 = vmul.f32 %v155, 1.442695
  %v215 = vpow.pop %v214
  %v216 = vmul.f32 %v156, 1.442695
  %v217 = vpow.pop %v216
  %v218 = vmul.f32 %v157, 1.442695
  %v219 = vpow.pop %v218
  %v220 = vmul.f32 %v158, 1.442695
  %v221 = vpow.pop %v220
  %v222 = vmul.f32 %v159, 1.442695
  %v223 = vpow.pop %v222
  %v224 = vadd.f32 %v161, 1.0
  %v225 = vadd.f32 %v163, 1.0
  %v226 = vadd.f32 %v165, 1.0
  %v227 = vadd.f32 %v167, 1.0
  %v228 = vadd.f32 %v169, 1.0
  %v229 = vadd.f32 %v171, 1.0
  %v230 = vadd.f32 %v173, 1.0
  %v231 = vadd.f32 %v175, 1.0
  %v232 = vadd.f32 %v177, 1.0
  %v233 = vadd.f32 %v179, 1.0
  %v234 = vadd.f32 %v181, 1.0
  %v235 = vadd.f32 %v183, 1.0
  %v236 = vadd.f32 %v185, 1.0
  %v237 = vadd.f32 %v187, 1.0
  %v238 = vadd.f32 %v189, 1.0
  %v239 = vadd.f32 %v191, 1.0
  %v240 = vadd.f32 %v193, 1.0
  %v241 = vadd.f32 %v195, 1.0
  %v242 = vadd.f32 %v197, 1.0
  %v243 = vadd.f32 %v199, 1.0
  %v244 = vadd.f32 %v201, 1.0
  %v245 = vadd.f32 %v203, 1.0
  %v246 = vadd.f32 %v205, 1.0
  %v247 = vadd.f32 %v207, 1.0
  %v248 = vadd.f32 %v209, 1.0
  %v249 = vadd.f32 %v211, 1.0
  %v250 = vadd.f32 %v213, 1.0
  %v251 = vadd.f32 %v215, 1.0
  %v252 = vadd.f32 %v217, 1.0
  %v253 = vadd.f32 %v219, 1.0
  %v254 = vadd.f32 %v221, 1.0
  %v255 = vadd.f32 %v223, 1.0
  %v256 = vrcp.pop %v224
  %v257 = vmul.f32 1.0, %v256
  %v258 = vrcp.pop %v225
  %v259 = vmul.f32 1.0, %v258
  %v260 = vrcp.pop %v226
  %v261 = vmul.f32 1.0, %v260
  %v262 = vrcp.pop %v227
  %v263 = vmul.f32 1.0, %v262
  %v264 = vrcp.pop %v228
  %v265 = vmul.f32 1.0, %v264
  %v266 = vrcp.pop %v229
  %v267 = vmul.f32 1.0, %v266
  %v268 = vrcp.pop %v230
  %v269 = vmul.f32 1.0, %v268
  %v270 = vrcp.pop %v231
  %v271 = vmul.f32 1.0, %v270
  %v272 = vrcp.pop %v232
  %v273 = vmul.f32 1.0, %v272
  %v274 = vrcp.pop %v233
  %v275 = vmul.f32 1.0, %v274
  %v276 = vrcp.pop %v234
  %v277 = vmul.f32 1.0, %v276
  %v278 = vrcp.pop %v235
  %v279 = vmul.f32 1.0, %v278
  %v280 = vrcp.pop %v236
  %v281 = vmul.f32 1.0, %v280
  %v282 = vrcp.pop %v237
  %v283 = vmul.f32 1.0, %v282
  %v284 = vrcp.pop %v238
  %v285 = vmul.f32 1.0, %v284
  %v286 = vrcp.pop %v239
  %v287 = vmul.f32 1.0, %v286
  %v288 = vrcp.pop %v240
  %v289 = vmul.f32 1.0, %v288
  %v290 = vrcp.pop %v241
  %v291 = vmul.f32 1.0, %v290
  %v292 = vrcp.pop %v242
  %v293 = vmul.f32 1.0, %v292
  %v294 = vrcp.pop %v243
  %v295 = vmul.f32 1.0, %v294
  %v296 = vrcp.pop %v244
  %v297 = vmul.f32 1.0, %v296
  %v298 = vrcp.pop %v245
  %v299 = vmul.f32 1.0, %v298
  %v300 = vrcp.pop %v246
  %v301 = vmul.f32 1.0, %v300
  %v302 = vrcp.pop %v247
  %v303 = vmul.f32 1.0, %v302
  %v304 = vrcp.pop %v248
  %v305 = vmul.f32 1.0, %v304
  %v306 = vrcp.pop %v249
  %v307 = vmul.f32 1.0, %v306
  %v308 = vrcp.pop %v250
  %v309 = vmul.f32 1.0, %v308
  %v310 = vrcp.pop %v251
  %v311 = vmul.f32 1.0, %v310
  %v312 = vrcp.pop %v252
  %v313 = vmul.f32 1.0, %v312
  %v314 = vrcp.pop %v253
  %v315 = vmul.f32 1.0, %v314
  %v316 = vrcp.pop %v254
  %v317 = vmul.f32 1.0, %v316
  %v318 = vrcp.pop %v255
  %v319 = vmul.f32 1.0, %v318
  %v320 = vpack.c.bf16 %v259, %v257
  %v321 = vpack.c.bf16 %v263, %v261
  %v322 = vpack.c.bf16 %v267, %v265
  %v323 = vpack.c.bf16 %v271, %v269
  %v324 = vpack.c.bf16 %v275, %v273
  %v325 = vpack.c.bf16 %v279, %v277
  %v326 = vpack.c.bf16 %v283, %v281
  %v327 = vpack.c.bf16 %v287, %v285
  %v328 = vpack.c.bf16 %v291, %v289
  %v329 = vpack.c.bf16 %v295, %v293
  %v330 = vpack.c.bf16 %v299, %v297
  %v331 = vpack.c.bf16 %v303, %v301
  %v332 = vpack.c.bf16 %v307, %v305
  %v333 = vpack.c.bf16 %v311, %v309
  %v334 = vpack.c.bf16 %v315, %v313
  %v335 = vpack.c.bf16 %v319, %v317
  %v336 = vld [vmem:[%s3] sm:$0xf]
  %v337 = vld [vmem:[%s3 + $0x4] sm:$0xf]
  %v338 = vld [vmem:[%s3 + $0x8] sm:$0xf]
  %v339 = vld [vmem:[%s3 + $0xc] sm:$0xf]
  %v340 = vld [vmem:[%s3 + $0x10] sm:$0xf]
  %v341 = vld [vmem:[%s3 + $0x14] sm:$0xf]
  %v342 = vld [vmem:[%s3 + $0x18] sm:$0xf]
  %v343 = vld [vmem:[%s3 + $0x1c] sm:$0xf]
  %v344 = vld [vmem:[%s3 + $0x20] sm:$0xf]
  %v345 = vld [vmem:[%s3 + $0x24] sm:$0xf]
  %v346 = vld [vmem:[%s3 + $0x28] sm:$0xf]
  %v347 = vld [vmem:[%s3 + $0x2c] sm:$0xf]
  %v348 = vld [vmem:[%s3 + $0x30] sm:$0xf]
  %v349 = vld [vmem:[%s3 + $0x34] sm:$0xf]
  %v350 = vld [vmem:[%s3 + $0x38] sm:$0xf]
  %v351 = vld [vmem:[%s3 + $0x3c] sm:$0xf]
  %v368 = vunpack.c.l.b16 %v336
  %v369 = vunpack.c.l.b16 %v337
  %v370 = vunpack.c.l.b16 %v338
  %v371 = vunpack.c.l.b16 %v339
  %v372 = vunpack.c.l.b16 %v340
  %v373 = vunpack.c.l.b16 %v341
  %v374 = vunpack.c.l.b16 %v342
  %v375 = vunpack.c.l.b16 %v343
  %v376 = vunpack.c.l.b16 %v344
  %v377 = vunpack.c.l.b16 %v345
  %v378 = vunpack.c.l.b16 %v346
  %v379 = vunpack.c.l.b16 %v347
  %v380 = vunpack.c.l.b16 %v348
  %v381 = vunpack.c.l.b16 %v349
  %v382 = vunpack.c.l.b16 %v350
  %v383 = vunpack.c.l.b16 %v351
  %v384 = vpack.c.b16 %v369, %v368
  %v385 = vpack.c.b16 %v371, %v370
  %v386 = vpack.c.b16 %v373, %v372
  %v387 = vpack.c.b16 %v375, %v374
  %v388 = vpack.c.b16 %v377, %v376
  %v389 = vpack.c.b16 %v379, %v378
  %v390 = vpack.c.b16 %v381, %v380
  %v391 = vpack.c.b16 %v383, %v382
  %400 = vmatprep.subr.bf16.mxu0 0
  %401 = vmatpush1.bf16.msra.mxu0 %v391
  %402 = vmatprep.subr.bf16.mxu0 0
  %403 = vmatpush1.bf16.msra.mxu0 %v390
  %404 = vmatprep.subr.bf16.mxu0 0
  %405 = vmatpush1.bf16.msra.mxu0 %v389
  %406 = vmatprep.subr.bf16.mxu0 0
  %407 = vmatpush1.bf16.msra.mxu0 %v388
  %408 = vmatprep.subr.bf16.mxu0 0
  %409 = vmatpush1.bf16.msra.mxu0 %v387
  %410 = vmatprep.subr.bf16.mxu0 0
  %411 = vmatpush1.bf16.msra.mxu0 %v386
  %412 = vmatprep.subr.bf16.mxu0 0
  %413 = vmatpush1.bf16.msra.mxu0 %v385
  %414 = vmatprep.subr.bf16.mxu0 0
  %415 = vmatpush1.bf16.msra.mxu0 %v384
  %416 = vmatprep.subr.bf16.mxu0 0
  %417 = vmatpush2.bf16.msra.mxu0 0
  %418 = vmatprep.subr.bf16.mxu0 0
  %419 = vmatpush2.bf16.msra.mxu0 0
  %420 = vmatprep.subr.bf16.mxu0 0
  %421 = vmatpush2.bf16.msra.mxu0 0
  %422 = vmatprep.subr.bf16.mxu0 0
  %423 = vmatpush2.bf16.msra.mxu0 0
  %424 = vmatprep.subr.bf16.mxu0 0
  %425 = vmatpush2.bf16.msra.mxu0 0
  %426 = vmatprep.subr.bf16.mxu0 0
  %427 = vmatpush2.bf16.msra.mxu0 0
  %428 = vmatprep.subr.bf16.mxu0 0
  %429 = vmatpush2.bf16.msra.mxu0 0
  %430 = vmatprep.subr.bf16.mxu0 0
  %431 = vmatpush2.bf16.msra.mxu0 0
  %432 = vmatprep.mubr.bf16.mxu0 0
  %433 = vmatmul.mubr.bf16.gmra.mxu0 %v320
  %v434 = vpop.f32.mrf.mxu0
  %v435 = vadd.f32 0.0, %v434
  %v436 = vpop.f32.mrf.mxu0
  %v437 = vpop.f32.mrf.mxu0
  %v438 = vadd.f32 0.0, %v437
  %v439 = vpop.f32.mrf.mxu0
  %440 = vmatprep.mubr.bf16.mxu0 0
  %441 = vmatmul.mubr.bf16.gmra.mxu0 %v321
  %v442 = vpop.f32.mrf.mxu0
  %v443 = vadd.f32 0.0, %v442
  %v444 = vpop.f32.mrf.mxu0
  %v445 = vpop.f32.mrf.mxu0
  %v446 = vadd.f32 0.0, %v445
  %v447 = vpop.f32.mrf.mxu0
  %448 = vmatprep.mubr.bf16.mxu0 0
  %449 = vmatmul.mubr.bf16.gmra.mxu0 %v322
  %v450 = vpop.f32.mrf.mxu0
  %v451 = vadd.f32 0.0, %v450
  %v452 = vpop.f32.mrf.mxu0
  %v453 = vpop.f32.mrf.mxu0
  %v454 = vadd.f32 0.0, %v453
  %v455 = vpop.f32.mrf.mxu0
  %456 = vmatprep.mubr.bf16.mxu0 0
  %457 = vmatmul.mubr.bf16.gmra.mxu0 %v323
  %v458 = vpop.f32.mrf.mxu0
  %v459 = vadd.f32 0.0, %v458
  %v460 = vpop.f32.mrf.mxu0
  %v461 = vpop.f32.mrf.mxu0
  %v462 = vadd.f32 0.0, %v461
  %v463 = vpop.f32.mrf.mxu0
  %464 = vmatprep.mubr.bf16.mxu0 0
  %465 = vmatmul.mubr.bf16.gmra.mxu0 %v324
  %v466 = vpop.f32.mrf.mxu0
  %v467 = vadd.f32 0.0, %v466
  %v468 = vpop.f32.mrf.mxu0
  %v469 = vpop.f32.mrf.mxu0
  %v470 = vadd.f32 0.0, %v469
  %v471 = vpop.f32.mrf.mxu0
  %472 = vmatprep.mubr.bf16.mxu0 0
  %473 = vmatmul.mubr.bf16.gmra.mxu0 %v325
  %v474 = vpop.f32.mrf.mxu0
  %v475 = vadd.f32 0.0, %v474
  %v476 = vpop.f32.mrf.mxu0
  %v477 = vpop.f32.mrf.mxu0
  %v478 = vadd.f32 0.0, %v477
  %v479 = vpop.f32.mrf.mxu0
  %480 = vmatprep.mubr.bf16.mxu0 0
  %481 = vmatmul.mubr.bf16.gmra.mxu0 %v326
  %v482 = vpop.f32.mrf.mxu0
  %v483 = vadd.f32 0.0, %v482
  %v484 = vpop.f32.mrf.mxu0
  %v485 = vpop.f32.mrf.mxu0
  %v486 = vadd.f32 0.0, %v485
  %v487 = vpop.f32.mrf.mxu0
  %488 = vmatprep.mubr.bf16.mxu0 0
  %489 = vmatmul.mubr.bf16.gmra.mxu0 %v327
  %v490 = vpop.f32.mrf.mxu0
  %v491 = vadd.f32 0.0, %v490
  %v492 = vpop.f32.mrf.mxu0
  %v493 = vpop.f32.mrf.mxu0
  %v494 = vadd.f32 0.0, %v493
  %v495 = vpop.f32.mrf.mxu0
  %496 = vmatprep.mubr.bf16.mxu0 0
  %497 = vmatmul.mubr.bf16.gmra.mxu0 %v328
  %v498 = vpop.f32.mrf.mxu0
  %v499 = vadd.f32 0.0, %v498
  %v500 = vpop.f32.mrf.mxu0
  %v501 = vpop.f32.mrf.mxu0
  %v502 = vadd.f32 0.0, %v501
  %v503 = vpop.f32.mrf.mxu0
  %504 = vmatprep.mubr.bf16.mxu0 0
  %505 = vmatmul.mubr.bf16.gmra.mxu0 %v329
  %v506 = vpop.f32.mrf.mxu0
  %v507 = vadd.f32 0.0, %v506
  %v508 = vpop.f32.mrf.mxu0
  %v509 = vpop.f32.mrf.mxu0
  %v510 = vadd.f32 0.0, %v509
  %v511 = vpop.f32.mrf.mxu0
  %512 = vmatprep.mubr.bf16.mxu0 0
  %513 = vmatmul.mubr.bf16.gmra.mxu0 %v330
  %v514 = vpop.f32.mrf.mxu0
  %v515 = vadd.f32 0.0, %v514
  %v516 = vpop.f32.mrf.mxu0
  %v517 = vpop.f32.mrf.mxu0
  %v518 = vadd.f32 0.0, %v517
  %v519 = vpop.f32.mrf.mxu0
  %520 = vmatprep.mubr.bf16.mxu0 0
  %521 = vmatmul.mubr.bf16.gmra.mxu0 %v331
  %v522 = vpop.f32.mrf.mxu0
  %v523 = vadd.f32 0.0, %v522
  %v524 = vpop.f32.mrf.mxu0
  %v525 = vpop.f32.mrf.mxu0
  %v526 = vadd.f32 0.0, %v525
  %v527 = vpop.f32.mrf.mxu0
  %528 = vmatprep.mubr.bf16.mxu0 0
  %529 = vmatmul.mubr.bf16.gmra.mxu0 %v332
  %v530 = vpop.f32.mrf.mxu0
  %v531 = vadd.f32 0.0, %v530
  %v532 = vpop.f32.mrf.mxu0
  %v533 = vpop.f32.mrf.mxu0
  %v534 = vadd.f32 0.0, %v533
  %v535 = vpop.f32.mrf.mxu0
  %536 = vmatprep.mubr.bf16.mxu0 0
  %537 = vmatmul.mubr.bf16.gmra.mxu0 %v333
  %v538 = vpop.f32.mrf.mxu0
  %v539 = vadd.f32 0.0, %v538
  %v540 = vpop.f32.mrf.mxu0
  %v541 = vpop.f32.mrf.mxu0
  %v542 = vadd.f32 0.0, %v541
  %v543 = vpop.f32.mrf.mxu0
  %544 = vmatprep.mubr.bf16.mxu0 0
  %545 = vmatmul.mubr.bf16.gmra.mxu0 %v334
  %v546 = vpop.f32.mrf.mxu0
  %v547 = vadd.f32 0.0, %v546
  %v548 = vpop.f32.mrf.mxu0
  %v549 = vpop.f32.mrf.mxu0
  %v550 = vadd.f32 0.0, %v549
  %v551 = vpop.f32.mrf.mxu0
  %552 = vmatprep.mubr.bf16.mxu0 0
  %553 = vmatmul.mubr.bf16.gmra.mxu0 %v335
  %v554 = vpop.f32.mrf.mxu0
  %v555 = vadd.f32 0.0, %v554
  %v556 = vpop.f32.mrf.mxu0
  %v557 = vpop.f32.mrf.mxu0
  %v558 = vadd.f32 0.0, %v557
  %v559 = vpop.f32.mrf.mxu0
  %560 = vdwg.mxu0
  %v561 = vpack.c.bf16 %v438, %v435
  %v562 = vpack.c.bf16 %v446, %v443
  %v563 = vpack.c.bf16 %v454, %v451
  %v564 = vpack.c.bf16 %v462, %v459
  %v565 = vpack.c.bf16 %v470, %v467
  %v566 = vpack.c.bf16 %v478, %v475
  %v567 = vpack.c.bf16 %v486, %v483
  %v568 = vpack.c.bf16 %v494, %v491
  %v569 = vpack.c.bf16 %v502, %v499
  %v570 = vpack.c.bf16 %v510, %v507
  %v571 = vpack.c.bf16 %v518, %v515
  %v572 = vpack.c.bf16 %v526, %v523
  %v573 = vpack.c.bf16 %v534, %v531
  %v574 = vpack.c.bf16 %v542, %v539
  %v575 = vpack.c.bf16 %v550, %v547
  %v576 = vpack.c.bf16 %v558, %v555
  %v593 = vunpack.c.l.b16 %v561
  %v594 = vunpack.c.h.b16 %v561
  %v595 = vunpack.c.l.b16 %v562
  %v596 = vunpack.c.h.b16 %v562
  %v597 = vunpack.c.l.b16 %v563
  %v598 = vunpack.c.h.b16 %v563
  %v599 = vunpack.c.l.b16 %v564
  %v600 = vunpack.c.h.b16 %v564
  %v601 = vunpack.c.l.b16 %v565
  %v602 = vunpack.c.h.b16 %v565
  %v603 = vunpack.c.l.b16 %v566
  %v604 = vunpack.c.h.b16 %v566
  %v605 = vunpack.c.l.b16 %v567
  %v606 = vunpack.c.h.b16 %v567
  %v607 = vunpack.c.l.b16 %v568
  %v608 = vunpack.c.h.b16 %v568
  %v609 = vunpack.c.l.b16 %v569
  %v610 = vunpack.c.h.b16 %v569
  %v611 = vunpack.c.l.b16 %v570
  %v612 = vunpack.c.h.b16 %v570
  %v613 = vunpack.c.l.b16 %v571
  %v614 = vunpack.c.h.b16 %v571
  %v615 = vunpack.c.l.b16 %v572
  %v616 = vunpack.c.h.b16 %v572
  %v617 = vunpack.c.l.b16 %v573
  %v618 = vunpack.c.h.b16 %v573
  %v619 = vunpack.c.l.b16 %v574
  %v620 = vunpack.c.h.b16 %v574
  %v621 = vunpack.c.l.b16 %v575
  %v622 = vunpack.c.h.b16 %v575
  %v623 = vunpack.c.l.b16 %v576
  %v624 = vunpack.c.h.b16 %v576
  %v625 = vpack.c.b16 %v593, %v593
  %v626 = vpack.c.b16 %v594, %v594
  %v627 = vpack.c.b16 %v595, %v595
  %v628 = vpack.c.b16 %v596, %v596
  %v629 = vpack.c.b16 %v597, %v597
  %v630 = vpack.c.b16 %v598, %v598
  %v631 = vpack.c.b16 %v599, %v599
  %v632 = vpack.c.b16 %v600, %v600
  %v633 = vpack.c.b16 %v601, %v601
  %v634 = vpack.c.b16 %v602, %v602
  %v635 = vpack.c.b16 %v603, %v603
  %v636 = vpack.c.b16 %v604, %v604
  %v637 = vpack.c.b16 %v605, %v605
  %v638 = vpack.c.b16 %v606, %v606
  %v639 = vpack.c.b16 %v607, %v607
  %v640 = vpack.c.b16 %v608, %v608
  %v641 = vpack.c.b16 %v609, %v609
  %v642 = vpack.c.b16 %v610, %v610
  %v643 = vpack.c.b16 %v611, %v611
  %v644 = vpack.c.b16 %v612, %v612
  %v645 = vpack.c.b16 %v613, %v613
  %v646 = vpack.c.b16 %v614, %v614
  %v647 = vpack.c.b16 %v615, %v615
  %v648 = vpack.c.b16 %v616, %v616
  %v649 = vpack.c.b16 %v617, %v617
  %v650 = vpack.c.b16 %v618, %v618
  %v651 = vpack.c.b16 %v619, %v619
  %v652 = vpack.c.b16 %v620, %v620
  %v653 = vpack.c.b16 %v621, %v621
  %v654 = vpack.c.b16 %v622, %v622
  %v655 = vpack.c.b16 %v623, %v623
  %v656 = vpack.c.b16 %v624, %v624
  %689 = vst [vmem:[%s4] sm:$0xf] %v625
  %690 = vst [vmem:[%s4 + $0x4] sm:$0xf] %v626
  %691 = vst [vmem:[%s4 + $0x8] sm:$0xf] %v627
  %692 = vst [vmem:[%s4 + $0xc] sm:$0xf] %v628
  %693 = vst [vmem:[%s4 + $0x10] sm:$0xf] %v629
  %694 = vst [vmem:[%s4 + $0x14] sm:$0xf] %v630
  %695 = vst [vmem:[%s4 + $0x18] sm:$0xf] %v631
  %696 = vst [vmem:[%s4 + $0x1c] sm:$0xf] %v632
  %697 = vst [vmem:[%s4 + $0x20] sm:$0xf] %v633
  %698 = vst [vmem:[%s4 + $0x24] sm:$0xf] %v634
  %699 = vst [vmem:[%s4 + $0x28] sm:$0xf] %v635
  %700 = vst [vmem:[%s4 + $0x2c] sm:$0xf] %v636
  %701 = vst [vmem:[%s4 + $0x30] sm:$0xf] %v637
  %702 = vst [vmem:[%s4 + $0x34] sm:$0xf] %v638
  %703 = vst [vmem:[%s4 + $0x38] sm:$0xf] %v639
  %704 = vst [vmem:[%s4 + $0x3c] sm:$0xf] %v640
  %705 = vst [vmem:[%s4 + $0x40] sm:$0xf] %v641
  %706 = vst [vmem:[%s4 + $0x44] sm:$0xf] %v642
  %707 = vst [vmem:[%s4 + $0x48] sm:$0xf] %v643
  %708 = vst [vmem:[%s4 + $0x4c] sm:$0xf] %v644
  %709 = vst [vmem:[%s4 + $0x50] sm:$0xf] %v645
  %710 = vst [vmem:[%s4 + $0x54] sm:$0xf] %v646
  %711 = vst [vmem:[%s4 + $0x58] sm:$0xf] %v647
  %712 = vst [vmem:[%s4 + $0x5c] sm:$0xf] %v648
  %713 = vst [vmem:[%s4 + $0x60] sm:$0xf] %v649
  %714 = vst [vmem:[%s4 + $0x64] sm:$0xf] %v650
  %715 = vst [vmem:[%s4 + $0x68] sm:$0xf] %v651
  %716 = vst [vmem:[%s4 + $0x6c] sm:$0xf] %v652
  %717 = vst [vmem:[%s4 + $0x70] sm:$0xf] %v653
  %718 = vst [vmem:[%s4 + $0x74] sm:$0xf] %v654
  %719 = vst [vmem:[%s4 + $0x78] sm:$0xf] %v655
  %720 = vst [vmem:[%s4 + $0x7c] sm:$0xf] %v656
  // Predicated region
  $region18: #{cgcnn_encoder_forward.7} parent=0 // pred_check
    _
  $region19: #{cgcnn_encoder_forward.7} parent=0 // pred_check_branch
    %722 = sbr.rel (0) target = $region21
  $region20: #{cgcnn_encoder_forward.7} parent=0 // pred_region
    _
  $region21: #{cgcnn_encoder_forward.7} parent=0 // pred_fallthru
    _
  // Predicated region
  $region22: #{cgcnn_encoder_forward.7} parent=0 // pred_check
    _
  $region23: #{cgcnn_encoder_forward.7} parent=0 // pred_check_branch
    %724 = sbr.rel (0) target = $region25
  $region24: #{cgcnn_encoder_forward.7} parent=0 // pred_region
    _
  $region25: #{cgcnn_encoder_forward.7} parent=0 // pred_fallthru
    _

// kernel: cgcnn_encoder_forward.11
$region0: #{cgcnn_encoder_forward.11}
  #allocation0 [shape = 'u32[]', space=smem, size = 0x4, offset = 0x4, fixed_abs, tag = 'smem constant byte address 0x4 - core index']
  #allocation1 [shape = 'u32[144,128]{1,0:T(1,128)}', space=vmem, size = 0x12000, scoped, tag = 'internal scratch']
  %s0 = inlined_call_operand.vmem [shape: f32[256,128], index: 0, kind: input, shape index: {}]
  %s1 = inlined_call_operand.vmem [shape: f32[1,128], index: 1, kind: input, shape index: {}]
  %s2 = inlined_call_operand.vmem [shape: f32[1,128], index: 2, kind: input, shape index: {}]
  %s3 = inlined_call_operand.vmem [shape: bf16[2,256], index: 3, kind: input, shape index: {}]
  %s4 = inlined_call_operand.vmem [shape: f32[2,1], index: 4, kind: input, shape index: {}]
  %s5 = inlined_call_operand.hbm [shape: f32[2,128], index: 5, kind: output, shape index: {}]
  %s6 = sld [smem:[#allocation0]]
  $region38: #{cgcnn_encoder_forward.11} parent=0
    _
  %s8 = ssub.s32 1, %s6
  %s9 = scalar_select 0, %s8, %s6
  $region1: #{cgcnn_encoder_forward.11} parent=0
    #allocation2 [shape = 'u8[1024]{0}', space=vmem, size = 0x400, scoped, tag = 'output window, operand 0, single buffered']
    #allocation3 [shape = 's32[1]{0}', space=sflag, size = 0x4, scoped, tag = 'scoped memory for cgcnn_encoder_forward.11']
    %10 = vsyncpa [#allocation3], 0
    // Predicated region
    $region2: #{cgcnn_encoder_forward.11} parent=1 // pred_check
      _
    $region3: #{cgcnn_encoder_forward.11} parent=1 // pred_check_branch
      %12 = sbr.rel (0) target = $region5
    $region4: #{cgcnn_encoder_forward.11} parent=1 // pred_region
      _
    $region5: #{cgcnn_encoder_forward.11} parent=1 // pred_fallthru
      _
    // Predicated region
    $region6: #{cgcnn_encoder_forward.11} parent=1 // pred_check
      _
    $region7: #{cgcnn_encoder_forward.11} parent=1 // pred_check_branch
      %14 = sbr.rel (0) target = $region9
    $region8: #{cgcnn_encoder_forward.11} parent=1 // pred_region
      _
    $region9: #{cgcnn_encoder_forward.11} parent=1 // pred_fallthru
      _
    // Predicated region
    $region10: #{cgcnn_encoder_forward.11} parent=1 // pred_check
      _
    $region11: #{cgcnn_encoder_forward.11} parent=1 // pred_check_branch
      %16 = sbr.rel (0) target = $region13
    $region12: #{cgcnn_encoder_forward.11} parent=1 // pred_region
      _
    $region13: #{cgcnn_encoder_forward.11} parent=1 // pred_fallthru
      _
    // Predicated region
    $region14: #{cgcnn_encoder_forward.11} parent=1 // pred_check
      _
    $region15: #{cgcnn_encoder_forward.11} parent=1 // pred_check_branch
      %18 = sbr.rel (0) target = $region17
    $region16: #{cgcnn_encoder_forward.11} parent=1 // pred_region
      _
    $region17: #{cgcnn_encoder_forward.11} parent=1 // pred_fallthru
      _
    // Predicated region
    $region18: #{cgcnn_encoder_forward.11} parent=1 // pred_check
      _
    $region19: #{cgcnn_encoder_forward.11} parent=1 // pred_check_branch
      %20 = sbr.rel (0) target = $region21
    $region20: #{cgcnn_encoder_forward.11} parent=1 // pred_region
      _
    $region21: #{cgcnn_encoder_forward.11} parent=1 // pred_fallthru
      _
    %p22 = scmp.eq.s32.totalorder 0, 0
    // Predicated region
    $region22: #{cgcnn_encoder_forward.11} parent=1 // pred_check
      %p23 = pneg %p22
    $region23: #{cgcnn_encoder_forward.11} parent=1 // pred_check_branch
      %25 = sbr.rel (%p23) target = $region25
    $region24: #{cgcnn_encoder_forward.11} parent=1 // pred_region
      %26 = vst [vmem:[#allocation2] sm:$0x3] 0.0
    $region25: #{cgcnn_encoder_forward.11} parent=1 // pred_fallthru
      _
    %v27 = vld [vmem:[%s0] sm:$0xff]
    %v28 = vld [vmem:[%s0 + $0x8] sm:$0xff]
    %v29 = vld [vmem:[%s0 + $0x10] sm:$0xff]
    %v30 = vld [vmem:[%s0 + $0x18] sm:$0xff]
    %v31 = vld [vmem:[%s0 + $0x20] sm:$0xff]
    %v32 = vld [vmem:[%s0 + $0x28] sm:$0xff]
    %v33 = vld [vmem:[%s0 + $0x30] sm:$0xff]
    %v34 = vld [vmem:[%s0 + $0x38] sm:$0xff]
    %v35 = vld [vmem:[%s0 + $0x40] sm:$0xff]
    %v36 = vld [vmem:[%s0 + $0x48] sm:$0xff]
    %v37 = vld [vmem:[%s0 + $0x50] sm:$0xff]
    %v38 = vld [vmem:[%s0 + $0x58] sm:$0xff]
    %v39 = vld [vmem:[%s0 + $0x60] sm:$0xff]
    %v40 = vld [vmem:[%s0 + $0x68] sm:$0xff]
    %v41 = vld [vmem:[%s0 + $0x70] sm:$0xff]
    %v42 = vld [vmem:[%s0 + $0x78] sm:$0xff]
    %v43 = vld [vmem:[%s0 + $0x80] sm:$0xff]
    %v44 = vld [vmem:[%s0 + $0x88] sm:$0xff]
    %v45 = vld [vmem:[%s0 + $0x90] sm:$0xff]
    %v46 = vld [vmem:[%s0 + $0x98] sm:$0xff]
    %v47 = vld [vmem:[%s0 + $0xa0] sm:$0xff]
    %v48 = vld [vmem:[%s0 + $0xa8] sm:$0xff]
    %v49 = vld [vmem:[%s0 + $0xb0] sm:$0xff]
    %v50 = vld [vmem:[%s0 + $0xb8] sm:$0xff]
    %v51 = vld [vmem:[%s0 + $0xc0] sm:$0xff]
    %v52 = vld [vmem:[%s0 + $0xc8] sm:$0xff]
    %v53 = vld [vmem:[%s0 + $0xd0] sm:$0xff]
    %v54 = vld [vmem:[%s0 + $0xd8] sm:$0xff]
    %v55 = vld [vmem:[%s0 + $0xe0] sm:$0xff]
    %v56 = vld [vmem:[%s0 + $0xe8] sm:$0xff]
    %v57 = vld [vmem:[%s0 + $0xf0] sm:$0xff]
    %v58 = vld [vmem:[%s0 + $0xf8] sm:$0xff]
    %v59 = vld [vmem:[%s1] sm:$0x1]
    %v61 = vlaneseq
    %v62 = vshrl.u32 %v61, 7
    %v63 = vsub.s32 0, %v62
    %v64 = vrot.slane %v59, %v63
    %v66 = vmul.f32 %v27, %v64
    %v67 = vmul.f32 %v28, %v64
    %v68 = vmul.f32 %v29, %v64
    %v69 = vmul.f32 %v30, %v64
    %v70 = vmul.f32 %v31, %v64
    %v71 = vmul.f32 %v32, %v64
    %v72 = vmul.f32 %v33, %v64
    %v73 = vmul.f32 %v34, %v64
    %v74 = vmul.f32 %v35, %v64
    %v75 = vmul.f32 %v36, %v64
    %v76 = vmul.f32 %v37, %v64
    %v77 = vmul.f32 %v38, %v64
    %v78 = vmul.f32 %v39, %v64
    %v79 = vmul.f32 %v40, %v64
    %v80 = vmul.f32 %v41, %v64
    %v81 = vmul.f32 %v42, %v64
    %v82 = vmul.f32 %v43, %v64
    %v83 = vmul.f32 %v44, %v64
    %v84 = vmul.f32 %v45, %v64
    %v85 = vmul.f32 %v46, %v64
    %v86 = vmul.f32 %v47, %v64
    %v87 = vmul.f32 %v48, %v64
    %v88 = vmul.f32 %v49, %v64
    %v89 = vmul.f32 %v50, %v64
    %v90 = vmul.f32 %v51, %v64
    %v91 = vmul.f32 %v52, %v64
    %v92 = vmul.f32 %v53, %v64
    %v93 = vmul.f32 %v54, %v64
    %v94 = vmul.f32 %v55, %v64
    %v95 = vmul.f32 %v56, %v64
    %v96 = vmul.f32 %v57, %v64
    %v97 = vmul.f32 %v58, %v64
    %v98 = vld [vmem:[%s2] sm:$0x1]
    %v100 = vlaneseq
    %v101 = vshrl.u32 %v100, 7
    %v102 = vsub.s32 0, %v101
    %v103 = vrot.slane %v98, %v102
    %v105 = vadd.f32 %v66, %v103
    %v106 = vadd.f32 %v67, %v103
    %v107 = vadd.f32 %v68, %v103
    %v108 = vadd.f32 %v69, %v103
    %v109 = vadd.f32 %v70, %v103
    %v110 = vadd.f32 %v71, %v103
    %v111 = vadd.f32 %v72, %v103
    %v112 = vadd.f32 %v73, %v103
    %v113 = vadd.f32 %v74, %v103
    %v114 = vadd.f32 %v75, %v103
    %v115 = vadd.f32 %v76, %v103
    %v116 = vadd.f32 %v77, %v103
    %v117 = vadd.f32 %v78, %v103
    %v118 = vadd.f32 %v79, %v103
    %v119 = vadd.f32 %v80, %v103
    %v120 = vadd.f32 %v81, %v103
    %v121 = vadd.f32 %v82, %v103
    %v122 = vadd.f32 %v83, %v103
    %v123 = vadd.f32 %v84, %v103
    %v124 = vadd.f32 %v85, %v103
    %v125 = vadd.f32 %v86, %v103
    %v126 = vadd.f32 %v87, %v103
    %v127 = vadd.f32 %v88, %v103
    %v128 = vadd.f32 %v89, %v103
    %v129 = vadd.f32 %v90, %v103
    %v130 = vadd.f32 %v91, %v103
    %v131 = vadd.f32 %v92, %v103
    %v132 = vadd.f32 %v93, %v103
    %v133 = vadd.f32 %v94, %v103
    %v134 = vadd.f32 %v95, %v103
    %v135 = vadd.f32 %v96, %v103
    %v136 = vadd.f32 %v97, %v103
    %v137 = vxor.u32 %v105, 2147483648
    %v138 = vxor.u32 %v106, 2147483648
    %v139 = vxor.u32 %v107, 2147483648
    %v140 = vxor.u32 %v108, 2147483648
    %v141 = vxor.u32 %v109, 2147483648
    %v142 = vxor.u32 %v110, 2147483648
    %v143 = vxor.u32 %v111, 2147483648
    %v144 = vxor.u32 %v112, 2147483648
    %v145 = vxor.u32 %v113, 2147483648
    %v146 = vxor.u32 %v114, 2147483648
    %v147 = vxor.u32 %v115, 2147483648
    %v148 = vxor.u32 %v116, 2147483648
    %v149 = vxor.u32 %v117, 2147483648
    %v150 = vxor.u32 %v118, 2147483648
    %v151 = vxor.u32 %v119, 2147483648
    %v152 = vxor.u32 %v120, 2147483648
    %v153 = vxor.u32 %v121, 2147483648
    %v154 = vxor.u32 %v122, 2147483648
    %v155 = vxor.u32 %v123, 2147483648
    %v156 = vxor.u32 %v124, 2147483648
    %v157 = vxor.u32 %v125, 2147483648
    %v158 = vxor.u32 %v126, 2147483648
    %v159 = vxor.u32 %v127, 2147483648
    %v160 = vxor.u32 %v128, 2147483648
    %v161 = vxor.u32 %v129, 2147483648
    %v162 = vxor.u32 %v130, 2147483648
    %v163 = vxor.u32 %v131, 2147483648
    %v164 = vxor.u32 %v132, 2147483648
    %v165 = vxor.u32 %v133, 2147483648
    %v166 = vxor.u32 %v134, 2147483648
    %v167 = vxor.u32 %v135, 2147483648
    %v168 = vxor.u32 %v136, 2147483648
    %v169 = vmul.f32 %v137, 1.442695
    %v170 = vpow.pop %v169
    %v171 = vmul.f32 %v138, 1.442695
    %v172 = vpow.pop %v171
    %v173 = vmul.f32 %v139, 1.442695
    %v174 = vpow.pop %v173
    %v175 = vmul.f32 %v140, 1.442695
    %v176 = vpow.pop %v175
    %v177 = vmul.f32 %v141, 1.442695
    %v178 = vpow.pop %v177
    %v179 = vmul.f32 %v142, 1.442695
    %v180 = vpow.pop %v179
    %v181 = vmul.f32 %v143, 1.442695
    %v182 = vpow.pop %v181
    %v183 = vmul.f32 %v144, 1.442695
    %v184 = vpow.pop %v183
    %v185 = vmul.f32 %v145, 1.442695
    %v186 = vpow.pop %v185
    %v187 = vmul.f32 %v146, 1.442695
    %v188 = vpow.pop %v187
    %v189 = vmul.f32 %v147, 1.442695
    %v190 = vpow.pop %v189
    %v191 = vmul.f32 %v148, 1.442695
    %v192 = vpow.pop %v191
    %v193 = vmul.f32 %v149, 1.442695
    %v194 = vpow.pop %v193
    %v195 = vmul.f32 %v150, 1.442695
    %v196 = vpow.pop %v195
    %v197 = vmul.f32 %v151, 1.442695
    %v198 = vpow.pop %v197
    %v199 = vmul.f32 %v152, 1.442695
    %v200 = vpow.pop %v199
    %v201 = vmul.f32 %v153, 1.442695
    %v202 = vpow.pop %v201
    %v203 = vmul.f32 %v154, 1.442695
    %v204 = vpow.pop %v203
    %v205 = vmul.f32 %v155, 1.442695
    %v206 = vpow.pop %v205
    %v207 = vmul.f32 %v156, 1.442695
    %v208 = vpow.pop %v207
    %v209 = vmul.f32 %v157, 1.442695
    %v210 = vpow.pop %v209
    %v211 = vmul.f32 %v158, 1.442695
    %v212 = vpow.pop %v211
    %v213 = vmul.f32 %v159, 1.442695
    %v214 = vpow.pop %v213
    %v215 = vmul.f32 %v160, 1.442695
    %v216 = vpow.pop %v215
    %v217 = vmul.f32 %v161, 1.442695
    %v218 = vpow.pop %v217
    %v219 = vmul.f32 %v162, 1.442695
    %v220 = vpow.pop %v219
    %v221 = vmul.f32 %v163, 1.442695
    %v222 = vpow.pop %v221
    %v223 = vmul.f32 %v164, 1.442695
    %v224 = vpow.pop %v223
    %v225 = vmul.f32 %v165, 1.442695
    %v226 = vpow.pop %v225
    %v227 = vmul.f32 %v166, 1.442695
    %v228 = vpow.pop %v227
    %v229 = vmul.f32 %v167, 1.442695
    %v230 = vpow.pop %v229
    %v231 = vmul.f32 %v168, 1.442695
    %v232 = vpow.pop %v231
    %v233 = vadd.f32 %v170, 1.0
    %v234 = vadd.f32 %v172, 1.0
    %v235 = vadd.f32 %v174, 1.0
    %v236 = vadd.f32 %v176, 1.0
    %v237 = vadd.f32 %v178, 1.0
    %v238 = vadd.f32 %v180, 1.0
    %v239 = vadd.f32 %v182, 1.0
    %v240 = vadd.f32 %v184, 1.0
    %v241 = vadd.f32 %v186, 1.0
    %v242 = vadd.f32 %v188, 1.0
    %v243 = vadd.f32 %v190, 1.0
    %v244 = vadd.f32 %v192, 1.0
    %v245 = vadd.f32 %v194, 1.0
    %v246 = vadd.f32 %v196, 1.0
    %v247 = vadd.f32 %v198, 1.0
    %v248 = vadd.f32 %v200, 1.0
    %v249 = vadd.f32 %v202, 1.0
    %v250 = vadd.f32 %v204, 1.0
    %v251 = vadd.f32 %v206, 1.0
    %v252 = vadd.f32 %v208, 1.0
    %v253 = vadd.f32 %v210, 1.0
    %v254 = vadd.f32 %v212, 1.0
    %v255 = vadd.f32 %v214, 1.0
    %v256 = vadd.f32 %v216, 1.0
    %v257 = vadd.f32 %v218, 1.0
    %v258 = vadd.f32 %v220, 1.0
    %v259 = vadd.f32 %v222, 1.0
    %v260 = vadd.f32 %v224, 1.0
    %v261 = vadd.f32 %v226, 1.0
    %v262 = vadd.f32 %v228, 1.0
    %v263 = vadd.f32 %v230, 1.0
    %v264 = vadd.f32 %v232, 1.0
    %v265 = vrcp.pop %v233
    %v266 = vmul.f32 1.0, %v265
    %v267 = vrcp.pop %v234
    %v268 = vmul.f32 1.0, %v267
    %v269 = vrcp.pop %v235
    %v270 = vmul.f32 1.0, %v269
    %v271 = vrcp.pop %v236
    %v272 = vmul.f32 1.0, %v271
    %v273 = vrcp.pop %v237
    %v274 = vmul.f32 1.0, %v273
    %v275 = vrcp.pop %v238
    %v276 = vmul.f32 1.0, %v275
    %v277 = vrcp.pop %v239
    %v278 = vmul.f32 1.0, %v277
    %v279 = vrcp.pop %v240
    %v280 = vmul.f32 1.0, %v279
    %v281 = vrcp.pop %v241
    %v282 = vmul.f32 1.0, %v281
    %v283 = vrcp.pop %v242
    %v284 = vmul.f32 1.0, %v283
    %v285 = vrcp.pop %v243
    %v286 = vmul.f32 1.0, %v285
    %v287 = vrcp.pop %v244
    %v288 = vmul.f32 1.0, %v287
    %v289 = vrcp.pop %v245
    %v290 = vmul.f32 1.0, %v289
    %v291 = vrcp.pop %v246
    %v292 = vmul.f32 1.0, %v291
    %v293 = vrcp.pop %v247
    %v294 = vmul.f32 1.0, %v293
    %v295 = vrcp.pop %v248
    %v296 = vmul.f32 1.0, %v295
    %v297 = vrcp.pop %v249
    %v298 = vmul.f32 1.0, %v297
    %v299 = vrcp.pop %v250
    %v300 = vmul.f32 1.0, %v299
    %v301 = vrcp.pop %v251
    %v302 = vmul.f32 1.0, %v301
    %v303 = vrcp.pop %v252
    %v304 = vmul.f32 1.0, %v303
    %v305 = vrcp.pop %v253
    %v306 = vmul.f32 1.0, %v305
    %v307 = vrcp.pop %v254
    %v308 = vmul.f32 1.0, %v307
    %v309 = vrcp.pop %v255
    %v310 = vmul.f32 1.0, %v309
    %v311 = vrcp.pop %v256
    %v312 = vmul.f32 1.0, %v311
    %v313 = vrcp.pop %v257
    %v314 = vmul.f32 1.0, %v313
    %v315 = vrcp.pop %v258
    %v316 = vmul.f32 1.0, %v315
    %v317 = vrcp.pop %v259
    %v318 = vmul.f32 1.0, %v317
    %v319 = vrcp.pop %v260
    %v320 = vmul.f32 1.0, %v319
    %v321 = vrcp.pop %v261
    %v322 = vmul.f32 1.0, %v321
    %v323 = vrcp.pop %v262
    %v324 = vmul.f32 1.0, %v323
    %v325 = vrcp.pop %v263
    %v326 = vmul.f32 1.0, %v325
    %v327 = vrcp.pop %v264
    %v328 = vmul.f32 1.0, %v327
    %v329 = vpack.c.bf16 %v268, %v266
    %v330 = vpack.c.bf16 %v272, %v270
    %v331 = vpack.c.bf16 %v276, %v274
    %v332 = vpack.c.bf16 %v280, %v278
    %v333 = vpack.c.bf16 %v284, %v282
    %v334 = vpack.c.bf16 %v288, %v286
    %v335 = vpack.c.bf16 %v292, %v290
    %v336 = vpack.c.bf16 %v296, %v294
    %v337 = vpack.c.bf16 %v300, %v298
    %v338 = vpack.c.bf16 %v304, %v302
    %v339 = vpack.c.bf16 %v308, %v306
    %v340 = vpack.c.bf16 %v312, %v310
    %v341 = vpack.c.bf16 %v316, %v314
    %v342 = vpack.c.bf16 %v320, %v318
    %v343 = vpack.c.bf16 %v324, %v322
    %v344 = vpack.c.bf16 %v328, %v326
    %v345 = vld [vmem:[#allocation2] sm:$0x3]
    %v346 = vld [vmem:[%s3] sm:$0x3]
    %v349 = vunpack.c.l.s4 1966171168
    %v350 = vunpack.c.0.s8 %v349
    %v351 = vlaneseq
    %v352 = vshrl.u32 %v351, 7
    %v353 = vsub.s32 %v350, %v352
    %v354 = vrot.slane %v346, %v353
    %v355 = vcombine.high %v354, %v354
    %v357 = vunpack.c.l.s4 1966171168
    %v358 = vunpack.c.0.s8 %v357
    %v359 = vlaneseq
    %v360 = vshrl.u32 %v359, 7
    %v361 = vsub.s32 %v358, %v360
    %v362 = vrot.slane %v354, %v361
    %v364 = vunpack.c.l.s4 1966171168
    %v365 = vunpack.c.0.s8 %v364
    %v366 = vlaneseq
    %v367 = vshrl.u32 %v366, 7
    %v368 = vsub.s32 %v365, %v367
    %v369 = vrot.slane %v355, %v368
    %372 = vmatprep.subr.bf16.mxu0 0
    %373 = vmatpush1.bf16.msra.mxu0 %v336
    %374 = vmatprep.subr.bf16.mxu0 0
    %375 = vmatpush1.bf16.msra.mxu0 %v335
    %376 = vmatprep.subr.bf16.mxu0 0
    %377 = vmatpush1.bf16.msra.mxu0 %v334
    %378 = vmatprep.subr.bf16.mxu0 0
    %379 = vmatpush1.bf16.msra.mxu0 %v333
    %380 = vmatprep.subr.bf16.mxu0 0
    %381 = vmatpush1.bf16.msra.mxu0 %v332
    %382 = vmatprep.subr.bf16.mxu0 0
    %383 = vmatpush1.bf16.msra.mxu0 %v331
    %384 = vmatprep.subr.bf16.mxu0 0
    %385 = vmatpush1.bf16.msra.mxu0 %v330
    %386 = vmatprep.subr.bf16.mxu0 0
    %387 = vmatpush1.bf16.msra.mxu0 %v329
    %388 = vmatprep.subr.bf16.mxu0 0
    %389 = vmatpush2.bf16.msra.mxu0 %v344
    %390 = vmatprep.subr.bf16.mxu0 0
    %391 = vmatpush2.bf16.msra.mxu0 %v343
    %392 = vmatprep.subr.bf16.mxu0 0
    %393 = vmatpush2.bf16.msra.mxu0 %v342
    %394 = vmatprep.subr.bf16.mxu0 0
    %395 = vmatpush2.bf16.msra.mxu0 %v341
    %396 = vmatprep.subr.bf16.mxu0 0
    %397 = vmatpush2.bf16.msra.mxu0 %v340
    %398 = vmatprep.subr.bf16.mxu0 0
    %399 = vmatpush2.bf16.msra.mxu0 %v339
    %400 = vmatprep.subr.bf16.mxu0 0
    %401 = vmatpush2.bf16.msra.mxu0 %v338
    %402 = vmatprep.subr.bf16.mxu0 0
    %403 = vmatpush2.bf16.msra.mxu0 %v337
    %404 = vmatprep.mubr.bf16.mxu0 %v369
    %405 = vmatmul.mubr.bf16.gmra.mxu0 %v362
    %v406 = vpop.f32.mrf.mxu0
    %v407 = vadd.f32 0.0, %v406
    %v408 = vpop.f32.mrf.mxu0
    %v409 = vpop.f32.mrf.mxu0
    %v410 = vpop.f32.mrf.mxu0
    %411 = vdwg.mxu0
    %v412 = vadd.f32 %v345, %v407
    %413 = vst [vmem:[#allocation2] sm:$0x3] %v412
    // Predicated region
    $region26: #{cgcnn_encoder_forward.11} parent=1 // pred_check
      %p414 = pneg %p22
    $region27: #{cgcnn_encoder_forward.11} parent=1 // pred_check_branch
      %416 = sbr.rel (%p414) target = $region29
    $region28: #{cgcnn_encoder_forward.11} parent=1 // pred_region
      %v417 = vld [vmem:[#allocation2] sm:$0x3]
      %v418 = vld [vmem:[%s4] sm:$0x3]
      %420 = vset.pattern.permute.xlu0 0
      %421 = vperm.xlu0 %420, %v418
      %v422 = vpop.permute.xlu0 %421
      %v424 = vmul.f32 %v417, %v422
      %425 = vst [vmem:[#allocation2] sm:$0x3] %v424
    $region29: #{cgcnn_encoder_forward.11} parent=1 // pred_fallthru
      _
    // Predicated region
    $region30: #{cgcnn_encoder_forward.11} parent=1 // pred_check
      _
    $region31: #{cgcnn_encoder_forward.11} parent=1 // pred_check_branch
      %427 = sbr.rel (0) target = $region33
    $region32: #{cgcnn_encoder_forward.11} parent=1 // pred_region
      %s429 = ssub.s32 32, 32
      %430 = vsyncadd [#allocation3], %s429
      %s432 = sshll.u32 [#allocation2], 4
      %s433 = int_to_ptr.vmem [resolvable:$true] %s432
      %435 = dma.vmem_to_hbm [thread:$0]  %s433, 32, %s5, [#allocation3]
    $region33: #{cgcnn_encoder_forward.11} parent=1 // pred_fallthru
      _
    // Predicated region
    $region34: #{cgcnn_encoder_forward.11} parent=1 // pred_check
      _
    $region35: #{cgcnn_encoder_forward.11} parent=1 // pred_check_branch
      %437 = sbr.rel (0) target = $region37
    $region36: #{cgcnn_encoder_forward.11} parent=1 // pred_region
      %438 = dma.done [#allocation3], 32
    $region37: #{cgcnn_encoder_forward.11} parent=1 // pred_fallthru
      _
    %439 = vsyncpa [#allocation3], 1

</llo_original>
